<compile_context>
chip_gen: v6e
topology: v6e:2x2x1
jax: 0.10.0
libtpu: 0.0.40
codegen_flags: <defaults>
</compile_context>

<pallas_src>
import jax
import jax.numpy as jnp
import numpy as np
from jax import lax
from jax.experimental import pallas as pl
from jax.experimental.pallas import tpu as pltpu

I_IN = 3        # GRU input feature size
H = 35          # GRU hidden size
L = 3           # stacked GRU layers
IN_PAD = 8      # layer-0 input features padded to a sublane multiple
G = 128         # fused gate lane width: 3*H = 105 padded to 128
TIME_UNROLL = 2 # timesteps per fori_loop iteration (static inner unroll)


def gru_linear_kernel(x_ref, h0_ref, wih0_ref, wih12_ref, whh_ref,
                      bih_ref, bhh_ref, wlin_ref, blin_ref,
                      out_ref, hseq_ref):
    """Single invocation: full sequence.

    x_ref    : (T, N, IN_PAD)  layer-0 input, features zero-padded 3 -> 8
    h0_ref   : (L, N, H)       initial hidden state
    wih0_ref : (IN_PAD, G)     layer-0 fused input->gate weights (r|z|n along lanes)
    wih12_ref: (L-1, H, G)     layers 1..2 fused input->gate weights
    whh_ref  : (L, H, G)       fused hidden->gate weights
    bih_ref  : (L, 1, G)       fused input biases
    bhh_ref  : (L, 1, G)       fused hidden biases
    wlin_ref : (1, H)          Linear weight row
    blin_ref : (1, 1)          Linear bias
    out_ref  : (T, N)          output (squeezed; wrapper restores trailing 1)
    hseq_ref : (T, N, H)       VMEM scratch: last-layer hidden per timestep
    """
    T = x_ref.shape[0]
    U = TIME_UNROLL if T % TIME_UNROLL == 0 else 1

    def layer_step(inp, h_prev, wih, whh, bih, bhh):
        # Fused gate matmuls: lanes [0:H)=r, [H:2H)=z, [2H:3H)=n, [3H:G)=zero pad.
        gi = jnp.dot(inp, wih, preferred_element_type=jnp.float32) + bih
        gh = jnp.dot(h_prev, whh, preferred_element_type=jnp.float32) + bhh
        rz = jax.nn.sigmoid(gi[:, :2 * H] + gh[:, :2 * H])   # one EUP push for r|z
        r = rz[:, :H]
        z = rz[:, H:2 * H]
        n = jnp.tanh(gi[:, 2 * H:3 * H] + r * gh[:, 2 * H:3 * H])
        return (1.0 - z) * n + z * h_prev

    def step(t, h0, h1, h2):
        xt = x_ref[t]                                         # (N, IN_PAD)
        h0 = layer_step(xt, h0, wih0_ref[...], whh_ref[0], bih_ref[0], bhh_ref[0])
        h1 = layer_step(h0, h1, wih12_ref[0], whh_ref[1], bih_ref[1], bhh_ref[1])
        h2 = layer_step(h1, h2, wih12_ref[1], whh_ref[2], bih_ref[2], bhh_ref[2])
        hseq_ref[t] = h2                                      # store top-layer hidden
        return h0, h1, h2

    def body(i, carry):
        h0, h1, h2 = carry
        for u in range(U):                                    # static unroll
            h0, h1, h2 = step(i * U + u, h0, h1, h2)
        return (h0, h1, h2)

    carry = (h0_ref[0], h0_ref[1], h0_ref[2])
    lax.fori_loop(0, T // U, body, carry)

    # Linear(35 -> 1) over the whole sequence at once, single store.
    hseq = hseq_ref[...]                                      # (T, N, H)
    y = jnp.sum(hseq * wlin_ref[...], axis=-1) + blin_ref[...]  # (T, N)
    out_ref[...] = y


def nueralnet_forward(x, h0, packed):
    T, N, _ = x.shape
    wih0, wih12, whh, bih, bhh, wlin, blin = packed

    # zero-pad layer-0 features 3 -> 8 (weight rows 3..7 are zero)
    x_pad = jnp.zeros((T, N, IN_PAD), jnp.float32).at[:, :, :I_IN].set(x)

    grid_spec = pltpu.PrefetchScalarGridSpec(
        num_scalar_prefetch=0,
        grid=(1,),                                            # whole sequence in one step
        in_specs=[
            pl.BlockSpec((T, N, IN_PAD), lambda i: (0, 0, 0)),    # x_pad
            pl.BlockSpec((L, N, H), lambda i: (0, 0, 0)),         # h0
            pl.BlockSpec((IN_PAD, G), lambda i: (0, 0)),          # w_ih layer 0
            pl.BlockSpec((L - 1, H, G), lambda i: (0, 0, 0)),     # w_ih layers 1..2
            pl.BlockSpec((L, H, G), lambda i: (0, 0, 0)),         # w_hh
            pl.BlockSpec((L, 1, G), lambda i: (0, 0, 0)),         # b_ih
            pl.BlockSpec((L, 1, G), lambda i: (0, 0, 0)),         # b_hh
            pl.BlockSpec((1, H), lambda i: (0, 0)),               # linear W
            pl.BlockSpec((1, 1), lambda i: (0, 0)),               # linear b
        ],
        out_specs=pl.BlockSpec((T, N), lambda i: (0, 0)),
        scratch_shapes=[pltpu.VMEM((T, N, H), jnp.float32)],
    )
    out = pl.pallas_call(
        gru_linear_kernel,
        out_shape=jax.ShapeDtypeStruct((T, N), jnp.float32),
        grid_spec=grid_spec,
        compiler_params=pltpu.CompilerParams(
            dimension_semantics=("arbitrary",)),              # recurrence => sequential
    )(x_pad, h0, wih0, wih12, whh, bih, bhh, wlin, blin)
    return out[..., None]                                     # (T, N, 1) like the module


# --------------------- parameter init (PyTorch-style) ----------------------

def init_params(key):
    """uniform(-1/sqrt(H), 1/sqrt(H)) like torch GRU/Linear default init."""
    k = 1.0 / np.sqrt(H)
    keys = jax.random.split(key, 4 * L + 2)
    raw = []
    for l in range(L):
        in_l = I_IN if l == 0 else H
        wih = jax.random.uniform(keys[4 * l + 0], (3 * H, in_l), minval=-k, maxval=k)
        whh = jax.random.uniform(keys[4 * l + 1], (3 * H, H), minval=-k, maxval=k)
        bih = jax.random.uniform(keys[4 * l + 2], (3 * H,), minval=-k, maxval=k)
        bhh = jax.random.uniform(keys[4 * l + 3], (3 * H,), minval=-k, maxval=k)
        raw.append((wih, whh, bih, bhh))
    wlin = jax.random.uniform(keys[-2], (1, H), minval=-k, maxval=k)
    blin = jax.random.uniform(keys[-1], (1,), minval=-k, maxval=k)
    return raw, wlin, blin


def pack_params(raw, wlin, blin):
    """Fuse per-gate weights into (K, 3H) matrices (gate order r|z|n along lanes),
    pad the lane dim 105 -> 128, pad layer-0 K dim 3 -> 8, transpose for x @ W."""
    lane_pad = G - 3 * H
    wih0 = None
    wih_rest, whh_all, bih_all, bhh_all = [], [], [], []
    for l, (wih, whh, bih, bhh) in enumerate(raw):
        wih_t = jnp.pad(wih.T, ((0, 0), (0, lane_pad)))       # (in_l, G)
        whh_t = jnp.pad(whh.T, ((0, 0), (0, lane_pad)))       # (H, G)
        bih_p = jnp.pad(bih, (0, lane_pad)).reshape(1, G)
        bhh_p = jnp.pad(bhh, (0, lane_pad)).reshape(1, G)
        if l == 0:
            wih0 = jnp.pad(wih_t, ((0, IN_PAD - I_IN), (0, 0)))   # (IN_PAD, G)
        else:
            wih_rest.append(wih_t)
        whh_all.append(whh_t)
        bih_all.append(bih_p)
        bhh_all.append(bhh_p)
    return (wih0.astype(jnp.float32),
            jnp.stack(wih_rest).astype(jnp.float32),          # (L-1, H, G)
            jnp.stack(whh_all).astype(jnp.float32),           # (L, H, G)
            jnp.stack(bih_all).astype(jnp.float32),           # (L, 1, G)
            jnp.stack(bhh_all).astype(jnp.float32),           # (L, 1, G)
            wlin.astype(jnp.float32),                         # (1, H)
            blin.reshape(1, 1).astype(jnp.float32))           # (1, 1)


# ------------------------- pure-JAX reference ------------------------------

def forward_ref(x, h0, raw, wlin, blin):
    hp = lax.Precision.HIGHEST
    T = x.shape[0]
    hs = [h0[l] for l in range(L)]
    outs = []
    for t in range(T):
        inp = x[t]
        for l in range(L):
            wih, whh, bih, bhh = raw[l]
            gi = jnp.dot(inp, wih.T, precision=hp) + bih
            gh = jnp.dot(hs[l], whh.T, precision=hp) + bhh
            i_r, i_z, i_n = jnp.split(gi, 3, axis=-1)
            h_r, h_z, h_n = jnp.split(gh, 3, axis=-1)
            r = jax.nn.sigmoid(i_r + h_r)
            z = jax.nn.sigmoid(i_z + h_z)
            n = jnp.tanh(i_n + r * h_n)
            h = (1.0 - z) * n + z * hs[l]
            hs[l] = h
            inp = h
        outs.append(jnp.dot(inp, wlin.T, precision=hp) + blin)
    return jnp.stack(outs, axis=0)


if __name__ == "__main__":
    key = jax.random.PRNGKey(0)
    k_param, k_x, k_h = jax.random.split(key, 3)

    # seq length matches the module's example call (58); small batch.
    T, N = 58, 2
    x = jax.random.normal(k_x, (T, N, I_IN), dtype=jnp.float32)
    h0 = jax.random.normal(k_h, (L, N, H), dtype=jnp.float32)

    raw, wlin, blin = init_params(k_param)
    packed = pack_params(raw, wlin, blin)

    out = nueralnet_forward(x, h0, packed)
    out = jax.block_until_ready(out)
    assert out.shape == (T, N, 1)

    ref = jax.jit(forward_ref)(x, h0, raw, wlin, blin)
    np.testing.assert_allclose(np.asarray(out), np.asarray(ref), rtol=2e-3, atol=2e-3)

    print("KERNEL_OK")
</pallas_src>

<mosaic_0001>
module attributes {stable_mosaic.version = 11 : i64} {
  func.func @gru_linear_kernel(%arg0: i32, %arg1: memref<58x2x8xf32, #tpu.memory_space<vmem>>, %arg2: memref<3x2x35xf32, #tpu.memory_space<vmem>>, %arg3: memref<8x128xf32, #tpu.memory_space<vmem>>, %arg4: memref<2x35x128xf32, #tpu.memory_space<vmem>>, %arg5: memref<3x35x128xf32, #tpu.memory_space<vmem>>, %arg6: memref<3x1x128xf32, #tpu.memory_space<vmem>>, %arg7: memref<3x1x128xf32, #tpu.memory_space<vmem>>, %arg8: memref<1x35xf32, #tpu.memory_space<vmem>>, %arg9: memref<1x1xf32, #tpu.memory_space<vmem>>, %arg10: memref<58x2xf32, #tpu.memory_space<vmem>>, %arg11: memref<58x2x35xf32, #tpu.memory_space<vmem>>) attributes {dimension_semantics = [#tpu.dimension_semantics<arbitrary>], iteration_bounds = array<i64: 1>, scalar_prefetch = 0 : i64, scratch_operands = 1 : i64, tpu.core_type = #tpu.core_type<tc>, window_params = [{pipeline_mode = #tpu.pipeline_mode<synchronous>, transform_indices = @transform_0, window_bounds = array<i64: 58, 2, 8>}, {pipeline_mode = #tpu.pipeline_mode<synchronous>, transform_indices = @transform_1, window_bounds = array<i64: 3, 2, 35>}, {pipeline_mode = #tpu.pipeline_mode<synchronous>, transform_indices = @transform_2, window_bounds = array<i64: 8, 128>}, {pipeline_mode = #tpu.pipeline_mode<synchronous>, transform_indices = @transform_3, window_bounds = array<i64: 2, 35, 128>}, {pipeline_mode = #tpu.pipeline_mode<synchronous>, transform_indices = @transform_4, window_bounds = array<i64: 3, 35, 128>}, {pipeline_mode = #tpu.pipeline_mode<synchronous>, transform_indices = @transform_5, window_bounds = array<i64: 3, 1, 128>}, {pipeline_mode = #tpu.pipeline_mode<synchronous>, transform_indices = @transform_6, window_bounds = array<i64: 3, 1, 128>}, {pipeline_mode = #tpu.pipeline_mode<synchronous>, transform_indices = @transform_7, window_bounds = array<i64: 1, 35>}, {pipeline_mode = #tpu.pipeline_mode<synchronous>, transform_indices = @transform_8, window_bounds = array<i64: 1, 1>}, {pipeline_mode = #tpu.pipeline_mode<synchronous>, transform_indices = @transform_9, window_bounds = array<i64: 58, 2>}]} {
    %c0 = arith.constant 0 : index
    %c0_0 = arith.constant 0 : index
    %c0_1 = arith.constant 0 : index
    %0 = vector.load %arg2[%c0, %c0_0, %c0_1] : memref<3x2x35xf32, #tpu.memory_space<vmem>>, vector<1x2x35xf32>
    %1 = vector.shape_cast %0 : vector<1x2x35xf32> to vector<2x35xf32>
    %c1 = arith.constant 1 : index
    %c0_2 = arith.constant 0 : index
    %c0_3 = arith.constant 0 : index
    %2 = vector.load %arg2[%c1, %c0_2, %c0_3] : memref<3x2x35xf32, #tpu.memory_space<vmem>>, vector<1x2x35xf32>
    %3 = vector.shape_cast %2 : vector<1x2x35xf32> to vector<2x35xf32>
    %c2 = arith.constant 2 : index
    %c0_4 = arith.constant 0 : index
    %c0_5 = arith.constant 0 : index
    %4 = vector.load %arg2[%c2, %c0_4, %c0_5] : memref<3x2x35xf32, #tpu.memory_space<vmem>>, vector<1x2x35xf32>
    %5 = vector.shape_cast %4 : vector<1x2x35xf32> to vector<2x35xf32>
    %c0_i32 = arith.constant 0 : i32
    %c29_i32 = arith.constant 29 : i32
    %6 = arith.addi %c0_i32, %c29_i32 : i32
    %c1_i32 = arith.constant 1 : i32
    %7:3 = scf.for %arg12 = %c0_i32 to %6 step %c1_i32 iter_args(%arg13 = %1, %arg14 = %3, %arg15 = %5) -> (vector<2x35xf32>, vector<2x35xf32>, vector<2x35xf32>)  : i32 {
      %c2_i32 = arith.constant 2 : i32
      %18 = arith.muli %arg12, %c2_i32 : i32
      %c0_i32_16 = arith.constant 0 : i32
      %19 = arith.addi %18, %c0_i32_16 : i32
      %20 = arith.index_cast %19 : i32 to index
      %c0_17 = arith.constant 0 : index
      %c0_18 = arith.constant 0 : index
      %21 = vector.load %arg1[%20, %c0_17, %c0_18] : memref<58x2x8xf32, #tpu.memory_space<vmem>>, vector<1x2x8xf32>
      %22 = vector.shape_cast %21 : vector<1x2x8xf32> to vector<2x8xf32>
      %c0_19 = arith.constant 0 : index
      %c0_20 = arith.constant 0 : index
      %23 = vector.load %arg3[%c0_19, %c0_20] : memref<8x128xf32, #tpu.memory_space<vmem>>, vector<8x128xf32>
      %c0_21 = arith.constant 0 : index
      %c0_22 = arith.constant 0 : index
      %c0_23 = arith.constant 0 : index
      %24 = vector.load %arg5[%c0_21, %c0_22, %c0_23] : memref<3x35x128xf32, #tpu.memory_space<vmem>>, vector<1x35x128xf32>
      %25 = vector.shape_cast %24 : vector<1x35x128xf32> to vector<35x128xf32>
      %c0_24 = arith.constant 0 : index
      %c0_25 = arith.constant 0 : index
      %c0_26 = arith.constant 0 : index
      %26 = vector.load %arg6[%c0_24, %c0_25, %c0_26] : memref<3x1x128xf32, #tpu.memory_space<vmem>>, vector<1x1x128xf32>
      %27 = vector.shape_cast %26 : vector<1x1x128xf32> to vector<1x128xf32>
      %c0_27 = arith.constant 0 : index
      %c0_28 = arith.constant 0 : index
      %c0_29 = arith.constant 0 : index
      %28 = vector.load %arg7[%c0_27, %c0_28, %c0_29] : memref<3x1x128xf32, #tpu.memory_space<vmem>>, vector<1x1x128xf32>
      %29 = vector.shape_cast %28 : vector<1x1x128xf32> to vector<1x128xf32>
      %cst_30 = arith.constant dense<0.000000e+00> : vector<2x128xf32>
      %30 = tpu.matmul %22, %23, %cst_30 {dimension_numbers = #tpu.dot_dimension_numbers<[1], [0], [0], [1], [0, 0, 1, 1], [], []>} : vector<2x8xf32>, vector<8x128xf32>, vector<2x128xf32> -> vector<2x128xf32>
      %31 = vector.broadcast %27 : vector<1x128xf32> to vector<2x128xf32>
      %32 = arith.addf %30, %31 : vector<2x128xf32>
      %cst_31 = arith.constant dense<0.000000e+00> : vector<2x128xf32>
      %33 = tpu.matmul %arg13, %25, %cst_31 {dimension_numbers = #tpu.dot_dimension_numbers<[1], [0], [0], [1], [0, 0, 1, 1], [], []>} : vector<2x35xf32>, vector<35x128xf32>, vector<2x128xf32> -> vector<2x128xf32>
      %34 = vector.broadcast %29 : vector<1x128xf32> to vector<2x128xf32>
      %35 = arith.addf %33, %34 : vector<2x128xf32>
      %36 = vector.extract_strided_slice %32 {offsets = [0, 0], sizes = [2, 70], strides = [1, 1]} : vector<2x128xf32> to vector<2x70xf32>
      %37 = vector.extract_strided_slice %35 {offsets = [0, 0], sizes = [2, 70], strides = [1, 1]} : vector<2x128xf32> to vector<2x70xf32>
      %38 = arith.addf %36, %37 : vector<2x70xf32>
      %39 = arith.negf %38 : vector<2x70xf32>
      %40 = math.exp %39 : vector<2x70xf32>
      %cst_32 = arith.constant 1.000000e+00 : f32
      %41 = vector.broadcast %cst_32 : f32 to vector<2x70xf32>
      %42 = arith.addf %41, %40 : vector<2x70xf32>
      %43 = arith.divf %41, %42 : vector<2x70xf32>
      %44 = vector.extract_strided_slice %43 {offsets = [0, 0], sizes = [2, 35], strides = [1, 1]} : vector<2x70xf32> to vector<2x35xf32>
      %45 = vector.extract_strided_slice %43 {offsets = [0, 35], sizes = [2, 35], strides = [1, 1]} : vector<2x70xf32> to vector<2x35xf32>
      %46 = vector.extract_strided_slice %32 {offsets = [0, 70], sizes = [2, 35], strides = [1, 1]} : vector<2x128xf32> to vector<2x35xf32>
      %47 = vector.extract_strided_slice %35 {offsets = [0, 70], sizes = [2, 35], strides = [1, 1]} : vector<2x128xf32> to vector<2x35xf32>
      %48 = arith.mulf %44, %47 : vector<2x35xf32>
      %49 = arith.addf %46, %48 : vector<2x35xf32>
      %50 = math.tanh %49 : vector<2x35xf32>
      %cst_33 = arith.constant 1.000000e+00 : f32
      %51 = vector.broadcast %cst_33 : f32 to vector<2x35xf32>
      %52 = arith.subf %51, %45 : vector<2x35xf32>
      %53 = arith.mulf %52, %50 : vector<2x35xf32>
      %54 = arith.mulf %45, %arg13 : vector<2x35xf32>
      %55 = arith.addf %53, %54 : vector<2x35xf32>
      %c0_34 = arith.constant 0 : index
      %c0_35 = arith.constant 0 : index
      %c0_36 = arith.constant 0 : index
      %56 = vector.load %arg4[%c0_34, %c0_35, %c0_36] : memref<2x35x128xf32, #tpu.memory_space<vmem>>, vector<1x35x128xf32>
      %57 = vector.shape_cast %56 : vector<1x35x128xf32> to vector<35x128xf32>
      %c1_37 = arith.constant 1 : index
      %c0_38 = arith.constant 0 : index
      %c0_39 = arith.constant 0 : index
      %58 = vector.load %arg5[%c1_37, %c0_38, %c0_39] : memref<3x35x128xf32, #tpu.memory_space<vmem>>, vector<1x35x128xf32>
      %59 = vector.shape_cast %58 : vector<1x35x128xf32> to vector<35x128xf32>
      %c1_40 = arith.constant 1 : index
      %c0_41 = arith.constant 0 : index
      %c0_42 = arith.constant 0 : index
      %60 = vector.load %arg6[%c1_40, %c0_41, %c0_42] : memref<3x1x128xf32, #tpu.memory_space<vmem>>, vector<1x1x128xf32>
      %61 = vector.shape_cast %60 : vector<1x1x128xf32> to vector<1x128xf32>
      %c1_43 = arith.constant 1 : index
      %c0_44 = arith.constant 0 : index
      %c0_45 = arith.constant 0 : index
      %62 = vector.load %arg7[%c1_43, %c0_44, %c0_45] : memref<3x1x128xf32, #tpu.memory_space<vmem>>, vector<1x1x128xf32>
      %63 = vector.shape_cast %62 : vector<1x1x128xf32> to vector<1x128xf32>
      %cst_46 = arith.constant dense<0.000000e+00> : vector<2x128xf32>
      %64 = tpu.matmul %55, %57, %cst_46 {dimension_numbers = #tpu.dot_dimension_numbers<[1], [0], [0], [1], [0, 0, 1, 1], [], []>} : vector<2x35xf32>, vector<35x128xf32>, vector<2x128xf32> -> vector<2x128xf32>
      %65 = vector.broadcast %61 : vector<1x128xf32> to vector<2x128xf32>
      %66 = arith.addf %64, %65 : vector<2x128xf32>
      %cst_47 = arith.constant dense<0.000000e+00> : vector<2x128xf32>
      %67 = tpu.matmul %arg14, %59, %cst_47 {dimension_numbers = #tpu.dot_dimension_numbers<[1], [0], [0], [1], [0, 0, 1, 1], [], []>} : vector<2x35xf32>, vector<35x128xf32>, vector<2x128xf32> -> vector<2x128xf32>
      %68 = vector.broadcast %63 : vector<1x128xf32> to vector<2x128xf32>
      %69 = arith.addf %67, %68 : vector<2x128xf32>
      %70 = vector.extract_strided_slice %66 {offsets = [0, 0], sizes = [2, 70], strides = [1, 1]} : vector<2x128xf32> to vector<2x70xf32>
      %71 = vector.extract_strided_slice %69 {offsets = [0, 0], sizes = [2, 70], strides = [1, 1]} : vector<2x128xf32> to vector<2x70xf32>
      %72 = arith.addf %70, %71 : vector<2x70xf32>
      %73 = arith.negf %72 : vector<2x70xf32>
      %74 = math.exp %73 : vector<2x70xf32>
      %cst_48 = arith.constant 1.000000e+00 : f32
      %75 = vector.broadcast %cst_48 : f32 to vector<2x70xf32>
      %76 = arith.addf %75, %74 : vector<2x70xf32>
      %77 = arith.divf %75, %76 : vector<2x70xf32>
      %78 = vector.extract_strided_slice %77 {offsets = [0, 0], sizes = [2, 35], strides = [1, 1]} : vector<2x70xf32> to vector<2x35xf32>
      %79 = vector.extract_strided_slice %77 {offsets = [0, 35], sizes = [2, 35], strides = [1, 1]} : vector<2x70xf32> to vector<2x35xf32>
      %80 = vector.extract_strided_slice %66 {offsets = [0, 70], sizes = [2, 35], strides = [1, 1]} : vector<2x128xf32> to vector<2x35xf32>
      %81 = vector.extract_strided_slice %69 {offsets = [0, 70], sizes = [2, 35], strides = [1, 1]} : vector<2x128xf32> to vector<2x35xf32>
      %82 = arith.mulf %78, %81 : vector<2x35xf32>
      %83 = arith.addf %80, %82 : vector<2x35xf32>
      %84 = math.tanh %83 : vector<2x35xf32>
      %cst_49 = arith.constant 1.000000e+00 : f32
      %85 = vector.broadcast %cst_49 : f32 to vector<2x35xf32>
      %86 = arith.subf %85, %79 : vector<2x35xf32>
      %87 = arith.mulf %86, %84 : vector<2x35xf32>
      %88 = arith.mulf %79, %arg14 : vector<2x35xf32>
      %89 = arith.addf %87, %88 : vector<2x35xf32>
      %c1_50 = arith.constant 1 : index
      %c0_51 = arith.constant 0 : index
      %c0_52 = arith.constant 0 : index
      %90 = vector.load %arg4[%c1_50, %c0_51, %c0_52] : memref<2x35x128xf32, #tpu.memory_space<vmem>>, vector<1x35x128xf32>
      %91 = vector.shape_cast %90 : vector<1x35x128xf32> to vector<35x128xf32>
      %c2_53 = arith.constant 2 : index
      %c0_54 = arith.constant 0 : index
      %c0_55 = arith.constant 0 : index
      %92 = vector.load %arg5[%c2_53, %c0_54, %c0_55] : memref<3x35x128xf32, #tpu.memory_space<vmem>>, vector<1x35x128xf32>
      %93 = vector.shape_cast %92 : vector<1x35x128xf32> to vector<35x128xf32>
      %c2_56 = arith.constant 2 : index
      %c0_57 = arith.constant 0 : index
      %c0_58 = arith.constant 0 : index
      %94 = vector.load %arg6[%c2_56, %c0_57, %c0_58] : memref<3x1x128xf32, #tpu.memory_space<vmem>>, vector<1x1x128xf32>
      %95 = vector.shape_cast %94 : vector<1x1x128xf32> to vector<1x128xf32>
      %c2_59 = arith.constant 2 : index
      %c0_60 = arith.constant 0 : index
      %c0_61 = arith.constant 0 : index
      %96 = vector.load %arg7[%c2_59, %c0_60, %c0_61] : memref<3x1x128xf32, #tpu.memory_space<vmem>>, vector<1x1x128xf32>
      %97 = vector.shape_cast %96 : vector<1x1x128xf32> to vector<1x128xf32>
      %cst_62 = arith.constant dense<0.000000e+00> : vector<2x128xf32>
      %98 = tpu.matmul %89, %91, %cst_62 {dimension_numbers = #tpu.dot_dimension_numbers<[1], [0], [0], [1], [0, 0, 1, 1], [], []>} : vector<2x35xf32>, vector<35x128xf32>, vector<2x128xf32> -> vector<2x128xf32>
      %99 = vector.broadcast %95 : vector<1x128xf32> to vector<2x128xf32>
      %100 = arith.addf %98, %99 : vector<2x128xf32>
      %cst_63 = arith.constant dense<0.000000e+00> : vector<2x128xf32>
      %101 = tpu.matmul %arg15, %93, %cst_63 {dimension_numbers = #tpu.dot_dimension_numbers<[1], [0], [0], [1], [0, 0, 1, 1], [], []>} : vector<2x35xf32>, vector<35x128xf32>, vector<2x128xf32> -> vector<2x128xf32>
      %102 = vector.broadcast %97 : vector<1x128xf32> to vector<2x128xf32>
      %103 = arith.addf %101, %102 : vector<2x128xf32>
      %104 = vector.extract_strided_slice %100 {offsets = [0, 0], sizes = [2, 70], strides = [1, 1]} : vector<2x128xf32> to vector<2x70xf32>
      %105 = vector.extract_strided_slice %103 {offsets = [0, 0], sizes = [2, 70], strides = [1, 1]} : vector<2x128xf32> to vector<2x70xf32>
      %106 = arith.addf %104, %105 : vector<2x70xf32>
      %107 = arith.negf %106 : vector<2x70xf32>
      %108 = math.exp %107 : vector<2x70xf32>
      %cst_64 = arith.constant 1.000000e+00 : f32
      %109 = vector.broadcast %cst_64 : f32 to vector<2x70xf32>
      %110 = arith.addf %109, %108 : vector<2x70xf32>
      %111 = arith.divf %109, %110 : vector<2x70xf32>
      %112 = vector.extract_strided_slice %111 {offsets = [0, 0], sizes = [2, 35], strides = [1, 1]} : vector<2x70xf32> to vector<2x35xf32>
      %113 = vector.extract_strided_slice %111 {offsets = [0, 35], sizes = [2, 35], strides = [1, 1]} : vector<2x70xf32> to vector<2x35xf32>
      %114 = vector.extract_strided_slice %100 {offsets = [0, 70], sizes = [2, 35], strides = [1, 1]} : vector<2x128xf32> to vector<2x35xf32>
      %115 = vector.extract_strided_slice %103 {offsets = [0, 70], sizes = [2, 35], strides = [1, 1]} : vector<2x128xf32> to vector<2x35xf32>
      %116 = arith.mulf %112, %115 : vector<2x35xf32>
      %117 = arith.addf %114, %116 : vector<2x35xf32>
      %118 = math.tanh %117 : vector<2x35xf32>
      %cst_65 = arith.constant 1.000000e+00 : f32
      %119 = vector.broadcast %cst_65 : f32 to vector<2x35xf32>
      %120 = arith.subf %119, %113 : vector<2x35xf32>
      %121 = arith.mulf %120, %118 : vector<2x35xf32>
      %122 = arith.mulf %113, %arg15 : vector<2x35xf32>
      %123 = arith.addf %121, %122 : vector<2x35xf32>
      %124 = arith.index_cast %19 : i32 to index
      %c0_66 = arith.constant 0 : index
      %c0_67 = arith.constant 0 : index
      %125 = vector.load %arg11[%124, %c0_66, %c0_67] : memref<58x2x35xf32, #tpu.memory_space<vmem>>, vector<1x2x35xf32>
      %126 = vector.shape_cast %125 : vector<1x2x35xf32> to vector<2x35xf32>
      %127 = vector.shape_cast %123 : vector<2x35xf32> to vector<1x2x35xf32>
      tpu.vector_store %arg11[%124, %c0_66, %c0_67], %127 {strides = array<i32>} : memref<58x2x35xf32, #tpu.memory_space<vmem>>, vector<1x2x35xf32>,
      %c2_i32_68 = arith.constant 2 : i32
      %128 = arith.muli %arg12, %c2_i32_68 : i32
      %c1_i32_69 = arith.constant 1 : i32
      %129 = arith.addi %128, %c1_i32_69 : i32
      %130 = arith.index_cast %129 : i32 to index
      %c0_70 = arith.constant 0 : index
      %c0_71 = arith.constant 0 : index
      %131 = vector.load %arg1[%130, %c0_70, %c0_71] : memref<58x2x8xf32, #tpu.memory_space<vmem>>, vector<1x2x8xf32>
      %132 = vector.shape_cast %131 : vector<1x2x8xf32> to vector<2x8xf32>
      %c0_72 = arith.constant 0 : index
      %c0_73 = arith.constant 0 : index
      %133 = vector.load %arg3[%c0_72, %c0_73] : memref<8x128xf32, #tpu.memory_space<vmem>>, vector<8x128xf32>
      %c0_74 = arith.constant 0 : index
      %c0_75 = arith.constant 0 : index
      %c0_76 = arith.constant 0 : index
      %134 = vector.load %arg5[%c0_74, %c0_75, %c0_76] : memref<3x35x128xf32, #tpu.memory_space<vmem>>, vector<1x35x128xf32>
      %135 = vector.shape_cast %134 : vector<1x35x128xf32> to vector<35x128xf32>
      %c0_77 = arith.constant 0 : index
      %c0_78 = arith.constant 0 : index
      %c0_79 = arith.constant 0 : index
      %136 = vector.load %arg6[%c0_77, %c0_78, %c0_79] : memref<3x1x128xf32, #tpu.memory_space<vmem>>, vector<1x1x128xf32>
      %137 = vector.shape_cast %136 : vector<1x1x128xf32> to vector<1x128xf32>
      %c0_80 = arith.constant 0 : index
      %c0_81 = arith.constant 0 : index
      %c0_82 = arith.constant 0 : index
      %138 = vector.load %arg7[%c0_80, %c0_81, %c0_82] : memref<3x1x128xf32, #tpu.memory_space<vmem>>, vector<1x1x128xf32>
      %139 = vector.shape_cast %138 : vector<1x1x128xf32> to vector<1x128xf32>
      %cst_83 = arith.constant dense<0.000000e+00> : vector<2x128xf32>
      %140 = tpu.matmul %132, %133, %cst_83 {dimension_numbers = #tpu.dot_dimension_numbers<[1], [0], [0], [1], [0, 0, 1, 1], [], []>} : vector<2x8xf32>, vector<8x128xf32>, vector<2x128xf32> -> vector<2x128xf32>
      %141 = vector.broadcast %137 : vector<1x128xf32> to vector<2x128xf32>
      %142 = arith.addf %140, %141 : vector<2x128xf32>
      %cst_84 = arith.constant dense<0.000000e+00> : vector<2x128xf32>
      %143 = tpu.matmul %55, %135, %cst_84 {dimension_numbers = #tpu.dot_dimension_numbers<[1], [0], [0], [1], [0, 0, 1, 1], [], []>} : vector<2x35xf32>, vector<35x128xf32>, vector<2x128xf32> -> vector<2x128xf32>
      %144 = vector.broadcast %139 : vector<1x128xf32> to vector<2x128xf32>
      %145 = arith.addf %143, %144 : vector<2x128xf32>
      %146 = vector.extract_strided_slice %142 {offsets = [0, 0], sizes = [2, 70], strides = [1, 1]} : vector<2x128xf32> to vector<2x70xf32>
      %147 = vector.extract_strided_slice %145 {offsets = [0, 0], sizes = [2, 70], strides = [1, 1]} : vector<2x128xf32> to vector<2x70xf32>
      %148 = arith.addf %146, %147 : vector<2x70xf32>
      %149 = arith.negf %148 : vector<2x70xf32>
      %150 = math.exp %149 : vector<2x70xf32>
      %cst_85 = arith.constant 1.000000e+00 : f32
      %151 = vector.broadcast %cst_85 : f32 to vector<2x70xf32>
      %152 = arith.addf %151, %150 : vector<2x70xf32>
      %153 = arith.divf %151, %152 : vector<2x70xf32>
      %154 = vector.extract_strided_slice %153 {offsets = [0, 0], sizes = [2, 35], strides = [1, 1]} : vector<2x70xf32> to vector<2x35xf32>
      %155 = vector.extract_strided_slice %153 {offsets = [0, 35], sizes = [2, 35], strides = [1, 1]} : vector<2x70xf32> to vector<2x35xf32>
      %156 = vector.extract_strided_slice %142 {offsets = [0, 70], sizes = [2, 35], strides = [1, 1]} : vector<2x128xf32> to vector<2x35xf32>
      %157 = vector.extract_strided_slice %145 {offsets = [0, 70], sizes = [2, 35], strides = [1, 1]} : vector<2x128xf32> to vector<2x35xf32>
      %158 = arith.mulf %154, %157 : vector<2x35xf32>
      %159 = arith.addf %156, %158 : vector<2x35xf32>
      %160 = math.tanh %159 : vector<2x35xf32>
      %cst_86 = arith.constant 1.000000e+00 : f32
      %161 = vector.broadcast %cst_86 : f32 to vector<2x35xf32>
      %162 = arith.subf %161, %155 : vector<2x35xf32>
      %163 = arith.mulf %162, %160 : vector<2x35xf32>
      %164 = arith.mulf %155, %55 : vector<2x35xf32>
      %165 = arith.addf %163, %164 : vector<2x35xf32>
      %c0_87 = arith.constant 0 : index
      %c0_88 = arith.constant 0 : index
      %c0_89 = arith.constant 0 : index
      %166 = vector.load %arg4[%c0_87, %c0_88, %c0_89] : memref<2x35x128xf32, #tpu.memory_space<vmem>>, vector<1x35x128xf32>
      %167 = vector.shape_cast %166 : vector<1x35x128xf32> to vector<35x128xf32>
      %c1_90 = arith.constant 1 : index
      %c0_91 = arith.constant 0 : index
      %c0_92 = arith.constant 0 : index
      %168 = vector.load %arg5[%c1_90, %c0_91, %c0_92] : memref<3x35x128xf32, #tpu.memory_space<vmem>>, vector<1x35x128xf32>
      %169 = vector.shape_cast %168 : vector<1x35x128xf32> to vector<35x128xf32>
      %c1_93 = arith.constant 1 : index
      %c0_94 = arith.constant 0 : index
      %c0_95 = arith.constant 0 : index
      %170 = vector.load %arg6[%c1_93, %c0_94, %c0_95] : memref<3x1x128xf32, #tpu.memory_space<vmem>>, vector<1x1x128xf32>
      %171 = vector.shape_cast %170 : vector<1x1x128xf32> to vector<1x128xf32>
      %c1_96 = arith.constant 1 : index
      %c0_97 = arith.constant 0 : index
      %c0_98 = arith.constant 0 : index
      %172 = vector.load %arg7[%c1_96, %c0_97, %c0_98] : memref<3x1x128xf32, #tpu.memory_space<vmem>>, vector<1x1x128xf32>
      %173 = vector.shape_cast %172 : vector<1x1x128xf32> to vector<1x128xf32>
      %cst_99 = arith.constant dense<0.000000e+00> : vector<2x128xf32>
      %174 = tpu.matmul %165, %167, %cst_99 {dimension_numbers = #tpu.dot_dimension_numbers<[1], [0], [0], [1], [0, 0, 1, 1], [], []>} : vector<2x35xf32>, vector<35x128xf32>, vector<2x128xf32> -> vector<2x128xf32>
      %175 = vector.broadcast %171 : vector<1x128xf32> to vector<2x128xf32>
      %176 = arith.addf %174, %175 : vector<2x128xf32>
      %cst_100 = arith.constant dense<0.000000e+00> : vector<2x128xf32>
      %177 = tpu.matmul %89, %169, %cst_100 {dimension_numbers = #tpu.dot_dimension_numbers<[1], [0], [0], [1], [0, 0, 1, 1], [], []>} : vector<2x35xf32>, vector<35x128xf32>, vector<2x128xf32> -> vector<2x128xf32>
      %178 = vector.broadcast %173 : vector<1x128xf32> to vector<2x128xf32>
      %179 = arith.addf %177, %178 : vector<2x128xf32>
      %180 = vector.extract_strided_slice %176 {offsets = [0, 0], sizes = [2, 70], strides = [1, 1]} : vector<2x128xf32> to vector<2x70xf32>
      %181 = vector.extract_strided_slice %179 {offsets = [0, 0], sizes = [2, 70], strides = [1, 1]} : vector<2x128xf32> to vector<2x70xf32>
      %182 = arith.addf %180, %181 : vector<2x70xf32>
      %183 = arith.negf %182 : vector<2x70xf32>
      %184 = math.exp %183 : vector<2x70xf32>
      %cst_101 = arith.constant 1.000000e+00 : f32
      %185 = vector.broadcast %cst_101 : f32 to vector<2x70xf32>
      %186 = arith.addf %185, %184 : vector<2x70xf32>
      %187 = arith.divf %185, %186 : vector<2x70xf32>
      %188 = vector.extract_strided_slice %187 {offsets = [0, 0], sizes = [2, 35], strides = [1, 1]} : vector<2x70xf32> to vector<2x35xf32>
      %189 = vector.extract_strided_slice %187 {offsets = [0, 35], sizes = [2, 35], strides = [1, 1]} : vector<2x70xf32> to vector<2x35xf32>
      %190 = vector.extract_strided_slice %176 {offsets = [0, 70], sizes = [2, 35], strides = [1, 1]} : vector<2x128xf32> to vector<2x35xf32>
      %191 = vector.extract_strided_slice %179 {offsets = [0, 70], sizes = [2, 35], strides = [1, 1]} : vector<2x128xf32> to vector<2x35xf32>
      %192 = arith.mulf %188, %191 : vector<2x35xf32>
      %193 = arith.addf %190, %192 : vector<2x35xf32>
      %194 = math.tanh %193 : vector<2x35xf32>
      %cst_102 = arith.constant 1.000000e+00 : f32
      %195 = vector.broadcast %cst_102 : f32 to vector<2x35xf32>
      %196 = arith.subf %195, %189 : vector<2x35xf32>
      %197 = arith.mulf %196, %194 : vector<2x35xf32>
      %198 = arith.mulf %189, %89 : vector<2x35xf32>
      %199 = arith.addf %197, %198 : vector<2x35xf32>
      %c1_103 = arith.constant 1 : index
      %c0_104 = arith.constant 0 : index
      %c0_105 = arith.constant 0 : index
      %200 = vector.load %arg4[%c1_103, %c0_104, %c0_105] : memref<2x35x128xf32, #tpu.memory_space<vmem>>, vector<1x35x128xf32>
      %201 = vector.shape_cast %200 : vector<1x35x128xf32> to vector<35x128xf32>
      %c2_106 = arith.constant 2 : index
      %c0_107 = arith.constant 0 : index
      %c0_108 = arith.constant 0 : index
      %202 = vector.load %arg5[%c2_106, %c0_107, %c0_108] : memref<3x35x128xf32, #tpu.memory_space<vmem>>, vector<1x35x128xf32>
      %203 = vector.shape_cast %202 : vector<1x35x128xf32> to vector<35x128xf32>
      %c2_109 = arith.constant 2 : index
      %c0_110 = arith.constant 0 : index
      %c0_111 = arith.constant 0 : index
      %204 = vector.load %arg6[%c2_109, %c0_110, %c0_111] : memref<3x1x128xf32, #tpu.memory_space<vmem>>, vector<1x1x128xf32>
      %205 = vector.shape_cast %204 : vector<1x1x128xf32> to vector<1x128xf32>
      %c2_112 = arith.constant 2 : index
      %c0_113 = arith.constant 0 : index
      %c0_114 = arith.constant 0 : index
      %206 = vector.load %arg7[%c2_112, %c0_113, %c0_114] : memref<3x1x128xf32, #tpu.memory_space<vmem>>, vector<1x1x128xf32>
      %207 = vector.shape_cast %206 : vector<1x1x128xf32> to vector<1x128xf32>
      %cst_115 = arith.constant dense<0.000000e+00> : vector<2x128xf32>
      %208 = tpu.matmul %199, %201, %cst_115 {dimension_numbers = #tpu.dot_dimension_numbers<[1], [0], [0], [1], [0, 0, 1, 1], [], []>} : vector<2x35xf32>, vector<35x128xf32>, vector<2x128xf32> -> vector<2x128xf32>
      %209 = vector.broadcast %205 : vector<1x128xf32> to vector<2x128xf32>
      %210 = arith.addf %208, %209 : vector<2x128xf32>
      %cst_116 = arith.constant dense<0.000000e+00> : vector<2x128xf32>
      %211 = tpu.matmul %123, %203, %cst_116 {dimension_numbers = #tpu.dot_dimension_numbers<[1], [0], [0], [1], [0, 0, 1, 1], [], []>} : vector<2x35xf32>, vector<35x128xf32>, vector<2x128xf32> -> vector<2x128xf32>
      %212 = vector.broadcast %207 : vector<1x128xf32> to vector<2x128xf32>
      %213 = arith.addf %211, %212 : vector<2x128xf32>
      %214 = vector.extract_strided_slice %210 {offsets = [0, 0], sizes = [2, 70], strides = [1, 1]} : vector<2x128xf32> to vector<2x70xf32>
      %215 = vector.extract_strided_slice %213 {offsets = [0, 0], sizes = [2, 70], strides = [1, 1]} : vector<2x128xf32> to vector<2x70xf32>
      %216 = arith.addf %214, %215 : vector<2x70xf32>
      %217 = arith.negf %216 : vector<2x70xf32>
      %218 = math.exp %217 : vector<2x70xf32>
      %cst_117 = arith.constant 1.000000e+00 : f32
      %219 = vector.broadcast %cst_117 : f32 to vector<2x70xf32>
      %220 = arith.addf %219, %218 : vector<2x70xf32>
      %221 = arith.divf %219, %220 : vector<2x70xf32>
      %222 = vector.extract_strided_slice %221 {offsets = [0, 0], sizes = [2, 35], strides = [1, 1]} : vector<2x70xf32> to vector<2x35xf32>
      %223 = vector.extract_strided_slice %221 {offsets = [0, 35], sizes = [2, 35], strides = [1, 1]} : vector<2x70xf32> to vector<2x35xf32>
      %224 = vector.extract_strided_slice %210 {offsets = [0, 70], sizes = [2, 35], strides = [1, 1]} : vector<2x128xf32> to vector<2x35xf32>
      %225 = vector.extract_strided_slice %213 {offsets = [0, 70], sizes = [2, 35], strides = [1, 1]} : vector<2x128xf32> to vector<2x35xf32>
      %226 = arith.mulf %222, %225 : vector<2x35xf32>
      %227 = arith.addf %224, %226 : vector<2x35xf32>
      %228 = math.tanh %227 : vector<2x35xf32>
      %cst_118 = arith.constant 1.000000e+00 : f32
      %229 = vector.broadcast %cst_118 : f32 to vector<2x35xf32>
      %230 = arith.subf %229, %223 : vector<2x35xf32>
      %231 = arith.mulf %230, %228 : vector<2x35xf32>
      %232 = arith.mulf %223, %123 : vector<2x35xf32>
      %233 = arith.addf %231, %232 : vector<2x35xf32>
      %234 = arith.index_cast %129 : i32 to index
      %c0_119 = arith.constant 0 : index
      %c0_120 = arith.constant 0 : index
      %235 = vector.load %arg11[%234, %c0_119, %c0_120] : memref<58x2x35xf32, #tpu.memory_space<vmem>>, vector<1x2x35xf32>
      %236 = vector.shape_cast %235 : vector<1x2x35xf32> to vector<2x35xf32>
      %237 = vector.shape_cast %233 : vector<2x35xf32> to vector<1x2x35xf32>
      tpu.vector_store %arg11[%234, %c0_119, %c0_120], %237 {strides = array<i32>} : memref<58x2x35xf32, #tpu.memory_space<vmem>>, vector<1x2x35xf32>,
      scf.yield %165, %199, %233 : vector<2x35xf32>, vector<2x35xf32>, vector<2x35xf32>
    }
    %c29_i32_6 = arith.constant 29 : i32
    %c0_7 = arith.constant 0 : index
    %c0_8 = arith.constant 0 : index
    %c0_9 = arith.constant 0 : index
    %8 = vector.load %arg11[%c0_7, %c0_8, %c0_9] : memref<58x2x35xf32, #tpu.memory_space<vmem>>, vector<58x2x35xf32>
    %c0_10 = arith.constant 0 : index
    %c0_11 = arith.constant 0 : index
    %9 = vector.load %arg8[%c0_10, %c0_11] : memref<1x35xf32, #tpu.memory_space<vmem>>, vector<1x35xf32>
    %10 = vector.shape_cast %9 : vector<1x35xf32> to vector<1x1x35xf32>
    %11 = vector.broadcast %10 : vector<1x1x35xf32> to vector<58x2x35xf32>
    %12 = arith.mulf %8, %11 : vector<58x2x35xf32>
    %cst = arith.constant dense<0.000000e+00> : vector<58x2xf32>
    %13 = vector.multi_reduction <add>, %12, %cst [2] : vector<58x2x35xf32> to vector<58x2xf32>
    %c0_12 = arith.constant 0 : index
    %c0_13 = arith.constant 0 : index
    %14 = vector.load %arg9[%c0_12, %c0_13] : memref<1x1xf32, #tpu.memory_space<vmem>>, vector<1x1xf32>
    %15 = vector.broadcast %14 : vector<1x1xf32> to vector<58x2xf32>
    %16 = arith.addf %13, %15 : vector<58x2xf32>
    %c0_14 = arith.constant 0 : index
    %c0_15 = arith.constant 0 : index
    %17 = vector.load %arg10[%c0_14, %c0_15] : memref<58x2xf32, #tpu.memory_space<vmem>>, vector<58x2xf32>
    tpu.vector_store %arg10[%c0_14, %c0_15], %16 {strides = array<i32>} : memref<58x2xf32, #tpu.memory_space<vmem>>, vector<58x2xf32>,
    return
  }
  func.func @transform_0(%arg0: i32) -> (i32, i32, i32) {
    %c0_i32 = arith.constant 0 : i32
    %c0_i32_0 = arith.constant 0 : i32
    %c0_i32_1 = arith.constant 0 : i32
    %c0_i32_2 = arith.constant 0 : i32
    return %c0_i32, %c0_i32_0, %c0_i32_1 : i32, i32, i32
  }
  func.func @transform_1(%arg0: i32) -> (i32, i32, i32) {
    %c0_i32 = arith.constant 0 : i32
    %c0_i32_0 = arith.constant 0 : i32
    %c0_i32_1 = arith.constant 0 : i32
    %c0_i32_2 = arith.constant 0 : i32
    return %c0_i32, %c0_i32_0, %c0_i32_1 : i32, i32, i32
  }
  func.func @transform_2(%arg0: i32) -> (i32, i32) {
    %c0_i32 = arith.constant 0 : i32
    %c0_i32_0 = arith.constant 0 : i32
    %c0_i32_1 = arith.constant 0 : i32
    return %c0_i32, %c0_i32_0 : i32, i32
  }
  func.func @transform_3(%arg0: i32) -> (i32, i32, i32) {
    %c0_i32 = arith.constant 0 : i32
    %c0_i32_0 = arith.constant 0 : i32
    %c0_i32_1 = arith.constant 0 : i32
    %c0_i32_2 = arith.constant 0 : i32
    return %c0_i32, %c0_i32_0, %c0_i32_1 : i32, i32, i32
  }
  func.func @transform_4(%arg0: i32) -> (i32, i32, i32) {
    %c0_i32 = arith.constant 0 : i32
    %c0_i32_0 = arith.constant 0 : i32
    %c0_i32_1 = arith.constant 0 : i32
    %c0_i32_2 = arith.constant 0 : i32
    return %c0_i32, %c0_i32_0, %c0_i32_1 : i32, i32, i32
  }
  func.func @transform_5(%arg0: i32) -> (i32, i32, i32) {
    %c0_i32 = arith.constant 0 : i32
    %c0_i32_0 = arith.constant 0 : i32
    %c0_i32_1 = arith.constant 0 : i32
    %c0_i32_2 = arith.constant 0 : i32
    return %c0_i32, %c0_i32_0, %c0_i32_1 : i32, i32, i32
  }
  func.func @transform_6(%arg0: i32) -> (i32, i32, i32) {
    %c0_i32 = arith.constant 0 : i32
    %c0_i32_0 = arith.constant 0 : i32
    %c0_i32_1 = arith.constant 0 : i32
    %c0_i32_2 = arith.constant 0 : i32
    return %c0_i32, %c0_i32_0, %c0_i32_1 : i32, i32, i32
  }
  func.func @transform_7(%arg0: i32) -> (i32, i32) {
    %c0_i32 = arith.constant 0 : i32
    %c0_i32_0 = arith.constant 0 : i32
    %c0_i32_1 = arith.constant 0 : i32
    return %c0_i32, %c0_i32_0 : i32, i32
  }
  func.func @transform_8(%arg0: i32) -> (i32, i32) {
    %c0_i32 = arith.constant 0 : i32
    %c0_i32_0 = arith.constant 0 : i32
    %c0_i32_1 = arith.constant 0 : i32
    return %c0_i32, %c0_i32_0 : i32, i32
  }
  func.func @transform_9(%arg0: i32) -> (i32, i32) {
    %c0_i32 = arith.constant 0 : i32
    %c0_i32_0 = arith.constant 0 : i32
    %c0_i32_1 = arith.constant 0 : i32
    return %c0_i32, %c0_i32_0 : i32, i32
  }
}

</mosaic_0001>

<llo_original>
// kernel: tpu_custom_call.1
$region0: #{tpu_custom_call.1}
  #allocation0 [shape = 'u32[]', space=smem, size = 0x4, offset = 0x4, fixed_abs, tag = 'smem constant byte address 0x4 - core index']
  #allocation1 [shape = 'u32[144,128]{1,0:T(1,128)}', space=vmem, size = 0x12000, scoped, tag = 'internal scratch']
  #allocation2 [shape = 'f32[58,2,35]{2,1,0:T(2,128)}', space=vmem, size = 0xe800, scoped, tag = 'scratch operand']
  #allocation3 [shape = 'f32[1,1]{1,0:T(1,128)S(1)}', space=vmem, size = 0x200, scoped, tag = 'scoped memory for tpu_custom_call.1']
  %s0 = inlined_call_operand.vmem [shape: f32[58,2,8], index: 0, kind: input, shape index: {}]
  %s1 = inlined_call_operand.vmem [shape: f32[3,2,35], index: 1, kind: input, shape index: {}]
  %s2 = inlined_call_operand.vmem [shape: f32[8,128], index: 2, kind: input, shape index: {}]
  %s3 = inlined_call_operand.vmem [shape: f32[2,35,128], index: 3, kind: input, shape index: {}]
  %s4 = inlined_call_operand.vmem [shape: f32[3,35,128], index: 4, kind: input, shape index: {}]
  %s5 = inlined_call_operand.vmem [shape: f32[3,1,128], index: 5, kind: input, shape index: {}]
  %s6 = inlined_call_operand.vmem [shape: f32[3,1,128], index: 6, kind: input, shape index: {}]
  %s7 = inlined_call_operand.vmem [shape: f32[1,35], index: 7, kind: input, shape index: {}]
  %s8 = inlined_call_operand.<no memory space> [shape: f32[1,1], index: 8, kind: input, shape index: {}]
  %s9 = inlined_call_operand.vmem [shape: f32[58,2], index: 9, kind: output, shape index: {}]
  %s10 = sld [smem:[#allocation0]]
  $region53: #{tpu_custom_call.1} parent=0
    _
  %s12 = ssub.s32 1, %s10
  %s13 = scalar_select 0, %s12, %s10
  %v14 = vstv %s8
  %15 = vst [vmem:[#allocation3] sm:$0x1] %v14
  // Predicated region
  $region2: #{tpu_custom_call.1} parent=0 // pred_check
    _
  $region3: #{tpu_custom_call.1} parent=0 // pred_check_branch
    %17 = sbr.rel (0) target = $region5
  $region4: #{tpu_custom_call.1} parent=0 // pred_region
    _
  $region5: #{tpu_custom_call.1} parent=0 // pred_fallthru
    _
  // Predicated region
  $region6: #{tpu_custom_call.1} parent=0 // pred_check
    _
  $region7: #{tpu_custom_call.1} parent=0 // pred_check_branch
    %19 = sbr.rel (0) target = $region9
  $region8: #{tpu_custom_call.1} parent=0 // pred_region
    _
  $region9: #{tpu_custom_call.1} parent=0 // pred_fallthru
    _
  // Predicated region
  $region10: #{tpu_custom_call.1} parent=0 // pred_check
    _
  $region11: #{tpu_custom_call.1} parent=0 // pred_check_branch
    %21 = sbr.rel (0) target = $region13
  $region12: #{tpu_custom_call.1} parent=0 // pred_region
    _
  $region13: #{tpu_custom_call.1} parent=0 // pred_fallthru
    _
  // Predicated region
  $region14: #{tpu_custom_call.1} parent=0 // pred_check
    _
  $region15: #{tpu_custom_call.1} parent=0 // pred_check_branch
    %23 = sbr.rel (0) target = $region17
  $region16: #{tpu_custom_call.1} parent=0 // pred_region
    _
  $region17: #{tpu_custom_call.1} parent=0 // pred_fallthru
    _
  // Predicated region
  $region18: #{tpu_custom_call.1} parent=0 // pred_check
    _
  $region19: #{tpu_custom_call.1} parent=0 // pred_check_branch
    %25 = sbr.rel (0) target = $region21
  $region20: #{tpu_custom_call.1} parent=0 // pred_region
    _
  $region21: #{tpu_custom_call.1} parent=0 // pred_fallthru
    _
  // Predicated region
  $region22: #{tpu_custom_call.1} parent=0 // pred_check
    _
  $region23: #{tpu_custom_call.1} parent=0 // pred_check_branch
    %27 = sbr.rel (0) target = $region25
  $region24: #{tpu_custom_call.1} parent=0 // pred_region
    _
  $region25: #{tpu_custom_call.1} parent=0 // pred_fallthru
    _
  // Predicated region
  $region26: #{tpu_custom_call.1} parent=0 // pred_check
    _
  $region27: #{tpu_custom_call.1} parent=0 // pred_check_branch
    %29 = sbr.rel (0) target = $region29
  $region28: #{tpu_custom_call.1} parent=0 // pred_region
    _
  $region29: #{tpu_custom_call.1} parent=0 // pred_fallthru
    _
  // Predicated region
  $region30: #{tpu_custom_call.1} parent=0 // pred_check
    _
  $region31: #{tpu_custom_call.1} parent=0 // pred_check_branch
    %31 = sbr.rel (0) target = $region33
  $region32: #{tpu_custom_call.1} parent=0 // pred_region
    _
  $region33: #{tpu_custom_call.1} parent=0 // pred_fallthru
    _
  // Predicated region
  $region34: #{tpu_custom_call.1} parent=0 // pred_check
    _
  $region35: #{tpu_custom_call.1} parent=0 // pred_check_branch
    %33 = sbr.rel (0) target = $region37
  $region36: #{tpu_custom_call.1} parent=0 // pred_region
    _
  $region37: #{tpu_custom_call.1} parent=0 // pred_fallthru
    _
  %v34 = vld [vmem:[%s1] sm:$0x3]
  %s35 = scalar_lea.vmem %s1, 2
  %v36 = vld [vmem:[%s35] sm:$0x3]
  %s37 = scalar_lea.vmem %s1, 4
  %v38 = vld [vmem:[%s37] sm:$0x3]
  loop: start=0, step=1, limit=29
  $region38: #{tpu_custom_call.1} parent=0 // loop_pre_header
    _
  $region39: #{tpu_custom_call.1} parent=0 // loop_header
    %s40 = sphi 0, %s44
    %p41 = scmp.ge.s32.totalorder %s40, 29
    %v45 = vphi %v34, %v897
    %v46 = vphi %v36, %v1098
    %v47 = vphi %v38, %v1283
  $region40: #{tpu_custom_call.1} parent=0 // loop_header_branch
    %43 = sbr.rel (%p41) target = $region44
  $region41: #{tpu_custom_call.1} parent=0 // loop_body
    %s48 = smul.u32 %s40, 2
    %s49 = smul.u32 %s48, 2
    %s50 = scalar_lea.vmem %s0, %s49
    %v51 = vld [vmem:[%s50] sm:$0x3]
    %v52 = vld [vmem:[%s2] sm:$0xff]
    %v53 = vld [vmem:[%s4] sm:$0xff]
    %v54 = vld [vmem:[%s4 + $0x8] sm:$0xff]
    %v55 = vld [vmem:[%s4 + $0x10] sm:$0xff]
    %v56 = vld [vmem:[%s4 + $0x18] sm:$0xff]
    %v57 = vld [vmem:[%s4 + $0x20] sm:$0x7]
    %v58 = vld [vmem:[%s5] sm:$0x1]
    %v59 = vld [vmem:[%s6] sm:$0x1]
    %v61 = vlaneseq
    %v62 = vshrl.u32 %v61, 7
    %v63 = vsub.s32 0, %v62
    %v64 = vrot.slane %v58, %v63
    %vm66 = vcmask 64512
    %v68 = vsel %vm66, %v51, 0
    %70 = vmatprep.subr.mxu0 0.0
    %71 = vmatpush1.msra.mxu0 0.0
    %72 = vmatprep.subr.mxu0 0.0
    %73 = vmatpush1.msra.mxu0 0.0
    %74 = vmatprep.subr.mxu0 0.0
    %75 = vmatpush1.msra.mxu0 0.0
    %76 = vmatprep.subr.mxu0 0.0
    %77 = vmatpush1.msra.mxu0 0.0
    %78 = vmatprep.subr.mxu0 0.0
    %79 = vmatpush1.msra.mxu0 0.0
    %80 = vmatprep.subr.mxu0 0.0
    %81 = vmatpush1.msra.mxu0 0.0
    %82 = vmatprep.subr.mxu0 0.0
    %83 = vmatpush1.msra.mxu0 0.0
    %84 = vmatprep.subr.mxu0 0.0
    %85 = vmatpush1.msra.mxu0 0.0
    %86 = vmatprep.subr.mxu0 0.0
    %87 = vmatpush1.msra.mxu0 0.0
    %88 = vmatprep.subr.mxu0 0.0
    %89 = vmatpush1.msra.mxu0 0.0
    %90 = vmatprep.subr.mxu0 0.0
    %91 = vmatpush1.msra.mxu0 0.0
    %92 = vmatprep.subr.mxu0 0.0
    %93 = vmatpush1.msra.mxu0 0.0
    %94 = vmatprep.subr.mxu0 0.0
    %95 = vmatpush1.msra.mxu0 0.0
    %96 = vmatprep.subr.mxu0 0.0
    %97 = vmatpush1.msra.mxu0 0.0
    %98 = vmatprep.subr.mxu0 0.0
    %99 = vmatpush1.msra.mxu0 0.0
    %100 = vmatprep.subr.mxu0 0.0
    %101 = vmatpush1.msra.mxu0 %v52
    %102 = vmatprep.subr.mxu0 0.0
    %103 = vmatpush2.msra.mxu0 0.0
    %104 = vmatprep.subr.mxu0 0.0
    %105 = vmatpush2.msra.mxu0 0.0
    %106 = vmatprep.subr.mxu0 0.0
    %107 = vmatpush2.msra.mxu0 0.0
    %108 = vmatprep.subr.mxu0 0.0
    %109 = vmatpush2.msra.mxu0 0.0
    %110 = vmatprep.subr.mxu0 0.0
    %111 = vmatpush2.msra.mxu0 0.0
    %112 = vmatprep.subr.mxu0 0.0
    %113 = vmatpush2.msra.mxu0 0.0
    %114 = vmatprep.subr.mxu0 0.0
    %115 = vmatpush2.msra.mxu0 0.0
    %116 = vmatprep.subr.mxu0 0.0
    %117 = vmatpush2.msra.mxu0 0.0
    %118 = vmatprep.subr.mxu0 0.0
    %119 = vmatpush2.msra.mxu0 0.0
    %120 = vmatprep.subr.mxu0 0.0
    %121 = vmatpush2.msra.mxu0 0.0
    %122 = vmatprep.subr.mxu0 0.0
    %123 = vmatpush2.msra.mxu0 0.0
    %124 = vmatprep.subr.mxu0 0.0
    %125 = vmatpush2.msra.mxu0 0.0
    %126 = vmatprep.subr.mxu0 0.0
    %127 = vmatpush2.msra.mxu0 0.0
    %128 = vmatprep.subr.mxu0 0.0
    %129 = vmatpush2.msra.mxu0 0.0
    %130 = vmatprep.subr.mxu0 0.0
    %131 = vmatpush2.msra.mxu0 0.0
    %132 = vmatprep.subr.mxu0 0.0
    %133 = vmatpush2.msra.mxu0 0.0
    %134 = vmatprep.mubr.f32.mxu0 0.0
    %135 = vmatmul.mubr.f32.gmra.mxu0 %v68
    %v136 = vpop.f32.mrf.mxu0
    %v137 = vadd.f32 %v64, %v136
    %v138 = vpop.f32.mrf.mxu0
    %139 = vdwg.mxu0
    %v141 = vlaneseq
    %v142 = vshrl.u32 %v141, 7
    %v143 = vsub.s32 0, %v142
    %v144 = vrot.slane %v59, %v143
    %vm146 = vcmask 285696
    %v148 = vsel %vm146, %v45, 0
    %vm150 = vcmask 1042432
    %v152 = vsel %vm150, %v57, 0
    %154 = vmatprep.subr.mxu0 0.0
    %155 = vmatpush1.msra.mxu0 0.0
    %156 = vmatprep.subr.mxu0 0.0
    %157 = vmatpush1.msra.mxu0 0.0
    %158 = vmatprep.subr.mxu0 0.0
    %159 = vmatpush1.msra.mxu0 0.0
    %160 = vmatprep.subr.mxu0 0.0
    %161 = vmatpush1.msra.mxu0 0.0
    %162 = vmatprep.subr.mxu0 0.0
    %163 = vmatpush1.msra.mxu0 0.0
    %164 = vmatprep.subr.mxu0 0.0
    %165 = vmatpush1.msra.mxu0 0.0
    %166 = vmatprep.subr.mxu0 0.0
    %167 = vmatpush1.msra.mxu0 0.0
    %168 = vmatprep.subr.mxu0 0.0
    %169 = vmatpush1.msra.mxu0 0.0
    %170 = vmatprep.subr.mxu0 0.0
    %171 = vmatpush1.msra.mxu0 0.0
    %172 = vmatprep.subr.mxu0 0.0
    %173 = vmatpush1.msra.mxu0 0.0
    %174 = vmatprep.subr.mxu0 0.0
    %175 = vmatpush1.msra.mxu0 0.0
    %176 = vmatprep.subr.mxu0 0.0
    %177 = vmatpush1.msra.mxu0 %v152
    %178 = vmatprep.subr.mxu0 0.0
    %179 = vmatpush1.msra.mxu0 %v56
    %180 = vmatprep.subr.mxu0 0.0
    %181 = vmatpush1.msra.mxu0 %v55
    %182 = vmatprep.subr.mxu0 0.0
    %183 = vmatpush1.msra.mxu0 %v54
    %184 = vmatprep.subr.mxu0 0.0
    %185 = vmatpush1.msra.mxu0 %v53
    %186 = vmatprep.subr.mxu0 0.0
    %187 = vmatpush2.msra.mxu0 0.0
    %188 = vmatprep.subr.mxu0 0.0
    %189 = vmatpush2.msra.mxu0 0.0
    %190 = vmatprep.subr.mxu0 0.0
    %191 = vmatpush2.msra.mxu0 0.0
    %192 = vmatprep.subr.mxu0 0.0
    %193 = vmatpush2.msra.mxu0 0.0
    %194 = vmatprep.subr.mxu0 0.0
    %195 = vmatpush2.msra.mxu0 0.0
    %196 = vmatprep.subr.mxu0 0.0
    %197 = vmatpush2.msra.mxu0 0.0
    %198 = vmatprep.subr.mxu0 0.0
    %199 = vmatpush2.msra.mxu0 0.0
    %200 = vmatprep.subr.mxu0 0.0
    %201 = vmatpush2.msra.mxu0 0.0
    %202 = vmatprep.subr.mxu0 0.0
    %203 = vmatpush2.msra.mxu0 0.0
    %204 = vmatprep.subr.mxu0 0.0
    %205 = vmatpush2.msra.mxu0 0.0
    %206 = vmatprep.subr.mxu0 0.0
    %207 = vmatpush2.msra.mxu0 0.0
    %208 = vmatprep.subr.mxu0 0.0
    %209 = vmatpush2.msra.mxu0 0.0
    %210 = vmatprep.subr.mxu0 0.0
    %211 = vmatpush2.msra.mxu0 0.0
    %212 = vmatprep.subr.mxu0 0.0
    %213 = vmatpush2.msra.mxu0 0.0
    %214 = vmatprep.subr.mxu0 0.0
    %215 = vmatpush2.msra.mxu0 0.0
    %216 = vmatprep.subr.mxu0 0.0
    %217 = vmatpush2.msra.mxu0 0.0
    %218 = vmatprep.mubr.f32.mxu0 0.0
    %219 = vmatmul.mubr.f32.gmra.mxu0 %v148
    %v220 = vpop.f32.mrf.mxu0
    %v221 = vadd.f32 %v144, %v220
    %v222 = vpop.f32.mrf.mxu0
    %223 = vdwg.mxu0
    %v224 = vadd.f32 %v137, %v221
    %v225 = vxor.u32 %v224, 2147483648
    %v226 = vmul.f32 %v225, 1.442695
    %v227 = vpow.pop %v226
    %v228 = vadd.f32 %v227, 1.0
    %v229 = vrcp.pop %v228
    %v230 = vmul.f32 1.0, %v229
    %232 = vrot.lane.b32.xlu0 %v221, 58
    %v233 = vpop.permute.xlu0 %232
    %v235 = vmul.f32 %v230, %v233
    %237 = vrot.lane.b32.xlu0 %v235, 70
    %v238 = vpop.permute.xlu0 %237
    %v240 = vadd.f32 %v137, %v238
    %v241 = vtanh.pop %v240
    %v242 = vsub.f32 1.0, %v230
    %244 = vrot.lane.b32.xlu0 %v241, 93
    %v245 = vpop.permute.xlu0 %244
    %v247 = vmul.f32 %v242, %v245
    %248 = vrot.lane.b32.xlu0 %v45, 35
    %v249 = vpop.permute.xlu0 %248
    %v251 = vmul.f32 %v230, %v249
    %v252 = vadd.f32 %v247, %v251
    %v253 = vld [vmem:[%s3] sm:$0xff]
    %v254 = vld [vmem:[%s3 + $0x8] sm:$0xff]
    %v255 = vld [vmem:[%s3 + $0x10] sm:$0xff]
    %v256 = vld [vmem:[%s3 + $0x18] sm:$0xff]
    %v257 = vld [vmem:[%s3 + $0x20] sm:$0x7]
    %s258 = scalar_lea.vmem %s4, 40
    %v259 = vld [vmem:[%s258] sm:$0xff]
    %v260 = vld [vmem:[%s258 + $0x8] sm:$0xff]
    %v261 = vld [vmem:[%s258 + $0x10] sm:$0xff]
    %v262 = vld [vmem:[%s258 + $0x18] sm:$0xff]
    %v263 = vld [vmem:[%s258 + $0x20] sm:$0x7]
    %s264 = scalar_lea.vmem %s5, 1
    %v265 = vld [vmem:[%s264] sm:$0x1]
    %s266 = scalar_lea.vmem %s6, 1
    %v267 = vld [vmem:[%s266] sm:$0x1]
    %v269 = vlaneseq
    %v270 = vshrl.u32 %v269, 7
    %v271 = vsub.s32 0, %v270
    %v272 = vrot.slane %v265, %v271
    %275 = vrot.lane.b32.xlu0 %v252, 93
    %v276 = vpop.permute.xlu0 %275
    %v277 = vsel %vm146, %v276, 0
    %v280 = vsel %vm150, %v257, 0
    %282 = vmatprep.subr.mxu0 0.0
    %283 = vmatpush1.msra.mxu0 0.0
    %284 = vmatprep.subr.mxu0 0.0
    %285 = vmatpush1.msra.mxu0 0.0
    %286 = vmatprep.subr.mxu0 0.0
    %287 = vmatpush1.msra.mxu0 0.0
    %288 = vmatprep.subr.mxu0 0.0
    %289 = vmatpush1.msra.mxu0 0.0
    %290 = vmatprep.subr.mxu0 0.0
    %291 = vmatpush1.msra.mxu0 0.0
    %292 = vmatprep.subr.mxu0 0.0
    %293 = vmatpush1.msra.mxu0 0.0
    %294 = vmatprep.subr.mxu0 0.0
    %295 = vmatpush1.msra.mxu0 0.0
    %296 = vmatprep.subr.mxu0 0.0
    %297 = vmatpush1.msra.mxu0 0.0
    %298 = vmatprep.subr.mxu0 0.0
    %299 = vmatpush1.msra.mxu0 0.0
    %300 = vmatprep.subr.mxu0 0.0
    %301 = vmatpush1.msra.mxu0 0.0
    %302 = vmatprep.subr.mxu0 0.0
    %303 = vmatpush1.msra.mxu0 0.0
    %304 = vmatprep.subr.mxu0 0.0
    %305 = vmatpush1.msra.mxu0 %v280
    %306 = vmatprep.subr.mxu0 0.0
    %307 = vmatpush1.msra.mxu0 %v256
    %308 = vmatprep.subr.mxu0 0.0
    %309 = vmatpush1.msra.mxu0 %v255
    %310 = vmatprep.subr.mxu0 0.0
    %311 = vmatpush1.msra.mxu0 %v254
    %312 = vmatprep.subr.mxu0 0.0
    %313 = vmatpush1.msra.mxu0 %v253
    %314 = vmatprep.subr.mxu0 0.0
    %315 = vmatpush2.msra.mxu0 0.0
    %316 = vmatprep.subr.mxu0 0.0
    %317 = vmatpush2.msra.mxu0 0.0
    %318 = vmatprep.subr.mxu0 0.0
    %319 = vmatpush2.msra.mxu0 0.0
    %320 = vmatprep.subr.mxu0 0.0
    %321 = vmatpush2.msra.mxu0 0.0
    %322 = vmatprep.subr.mxu0 0.0
    %323 = vmatpush2.msra.mxu0 0.0
    %324 = vmatprep.subr.mxu0 0.0
    %325 = vmatpush2.msra.mxu0 0.0
    %326 = vmatprep.subr.mxu0 0.0
    %327 = vmatpush2.msra.mxu0 0.0
    %328 = vmatprep.subr.mxu0 0.0
    %329 = vmatpush2.msra.mxu0 0.0
    %330 = vmatprep.subr.mxu0 0.0
    %331 = vmatpush2.msra.mxu0 0.0
    %332 = vmatprep.subr.mxu0 0.0
    %333 = vmatpush2.msra.mxu0 0.0
    %334 = vmatprep.subr.mxu0 0.0
    %335 = vmatpush2.msra.mxu0 0.0
    %336 = vmatprep.subr.mxu0 0.0
    %337 = vmatpush2.msra.mxu0 0.0
    %338 = vmatprep.subr.mxu0 0.0
    %339 = vmatpush2.msra.mxu0 0.0
    %340 = vmatprep.subr.mxu0 0.0
    %341 = vmatpush2.msra.mxu0 0.0
    %342 = vmatprep.subr.mxu0 0.0
    %343 = vmatpush2.msra.mxu0 0.0
    %344 = vmatprep.subr.mxu0 0.0
    %345 = vmatpush2.msra.mxu0 0.0
    %346 = vmatprep.mubr.f32.mxu0 0.0
    %347 = vmatmul.mubr.f32.gmra.mxu0 %v277
    %v348 = vpop.f32.mrf.mxu0
    %v349 = vadd.f32 %v272, %v348
    %v350 = vpop.f32.mrf.mxu0
    %351 = vdwg.mxu0
    %v353 = vlaneseq
    %v354 = vshrl.u32 %v353, 7
    %v355 = vsub.s32 0, %v354
    %v356 = vrot.slane %v267, %v355
    %v359 = vsel %vm146, %v46, 0
    %v362 = vsel %vm150, %v263, 0
    %364 = vmatprep.subr.mxu0 0.0
    %365 = vmatpush1.msra.mxu0 0.0
    %366 = vmatprep.subr.mxu0 0.0
    %367 = vmatpush1.msra.mxu0 0.0
    %368 = vmatprep.subr.mxu0 0.0
    %369 = vmatpush1.msra.mxu0 0.0
    %370 = vmatprep.subr.mxu0 0.0
    %371 = vmatpush1.msra.mxu0 0.0
    %372 = vmatprep.subr.mxu0 0.0
    %373 = vmatpush1.msra.mxu0 0.0
    %374 = vmatprep.subr.mxu0 0.0
    %375 = vmatpush1.msra.mxu0 0.0
    %376 = vmatprep.subr.mxu0 0.0
    %377 = vmatpush1.msra.mxu0 0.0
    %378 = vmatprep.subr.mxu0 0.0
    %379 = vmatpush1.msra.mxu0 0.0
    %380 = vmatprep.subr.mxu0 0.0
    %381 = vmatpush1.msra.mxu0 0.0
    %382 = vmatprep.subr.mxu0 0.0
    %383 = vmatpush1.msra.mxu0 0.0
    %384 = vmatprep.subr.mxu0 0.0
    %385 = vmatpush1.msra.mxu0 0.0
    %386 = vmatprep.subr.mxu0 0.0
    %387 = vmatpush1.msra.mxu0 %v362
    %388 = vmatprep.subr.mxu0 0.0
    %389 = vmatpush1.msra.mxu0 %v262
    %390 = vmatprep.subr.mxu0 0.0
    %391 = vmatpush1.msra.mxu0 %v261
    %392 = vmatprep.subr.mxu0 0.0
    %393 = vmatpush1.msra.mxu0 %v260
    %394 = vmatprep.subr.mxu0 0.0
    %395 = vmatpush1.msra.mxu0 %v259
    %396 = vmatprep.subr.mxu0 0.0
    %397 = vmatpush2.msra.mxu0 0.0
    %398 = vmatprep.subr.mxu0 0.0
    %399 = vmatpush2.msra.mxu0 0.0
    %400 = vmatprep.subr.mxu0 0.0
    %401 = vmatpush2.msra.mxu0 0.0
    %402 = vmatprep.subr.mxu0 0.0
    %403 = vmatpush2.msra.mxu0 0.0
    %404 = vmatprep.subr.mxu0 0.0
    %405 = vmatpush2.msra.mxu0 0.0
    %406 = vmatprep.subr.mxu0 0.0
    %407 = vmatpush2.msra.mxu0 0.0
    %408 = vmatprep.subr.mxu0 0.0
    %409 = vmatpush2.msra.mxu0 0.0
    %410 = vmatprep.subr.mxu0 0.0
    %411 = vmatpush2.msra.mxu0 0.0
    %412 = vmatprep.subr.mxu0 0.0
    %413 = vmatpush2.msra.mxu0 0.0
    %414 = vmatprep.subr.mxu0 0.0
    %415 = vmatpush2.msra.mxu0 0.0
    %416 = vmatprep.subr.mxu0 0.0
    %417 = vmatpush2.msra.mxu0 0.0
    %418 = vmatprep.subr.mxu0 0.0
    %419 = vmatpush2.msra.mxu0 0.0
    %420 = vmatprep.subr.mxu0 0.0
    %421 = vmatpush2.msra.mxu0 0.0
    %422 = vmatprep.subr.mxu0 0.0
    %423 = vmatpush2.msra.mxu0 0.0
    %424 = vmatprep.subr.mxu0 0.0
    %425 = vmatpush2.msra.mxu0 0.0
    %426 = vmatprep.subr.mxu0 0.0
    %427 = vmatpush2.msra.mxu0 0.0
    %428 = vmatprep.mubr.f32.mxu0 0.0
    %429 = vmatmul.mubr.f32.gmra.mxu0 %v359
    %v430 = vpop.f32.mrf.mxu0
    %v431 = vadd.f32 %v356, %v430
    %v432 = vpop.f32.mrf.mxu0
    %433 = vdwg.mxu0
    %v434 = vadd.f32 %v349, %v431
    %v435 = vxor.u32 %v434, 2147483648
    %v436 = vmul.f32 %v435, 1.442695
    %v437 = vpow.pop %v436
    %v438 = vadd.f32 %v437, 1.0
    %v439 = vrcp.pop %v438
    %v440 = vmul.f32 1.0, %v439
    %442 = vrot.lane.b32.xlu0 %v431, 58
    %v443 = vpop.permute.xlu0 %442
    %v445 = vmul.f32 %v440, %v443
    %447 = vrot.lane.b32.xlu0 %v445, 70
    %v448 = vpop.permute.xlu0 %447
    %v450 = vadd.f32 %v349, %v448
    %v451 = vtanh.pop %v450
    %v452 = vsub.f32 1.0, %v440
    %454 = vrot.lane.b32.xlu0 %v451, 93
    %v455 = vpop.permute.xlu0 %454
    %v457 = vmul.f32 %v452, %v455
    %458 = vrot.lane.b32.xlu0 %v46, 35
    %v459 = vpop.permute.xlu0 %458
    %v461 = vmul.f32 %v440, %v459
    %v462 = vadd.f32 %v457, %v461
    %s463 = scalar_lea.vmem %s3, 40
    %v464 = vld [vmem:[%s463] sm:$0xff]
    %v465 = vld [vmem:[%s463 + $0x8] sm:$0xff]
    %v466 = vld [vmem:[%s463 + $0x10] sm:$0xff]
    %v467 = vld [vmem:[%s463 + $0x18] sm:$0xff]
    %v468 = vld [vmem:[%s463 + $0x20] sm:$0x7]
    %s469 = scalar_lea.vmem %s4, 80
    %v470 = vld [vmem:[%s469] sm:$0xff]
    %v471 = vld [vmem:[%s469 + $0x8] sm:$0xff]
    %v472 = vld [vmem:[%s469 + $0x10] sm:$0xff]
    %v473 = vld [vmem:[%s469 + $0x18] sm:$0xff]
    %v474 = vld [vmem:[%s469 + $0x20] sm:$0x7]
    %s475 = scalar_lea.vmem %s5, 2
    %v476 = vld [vmem:[%s475] sm:$0x1]
    %s477 = scalar_lea.vmem %s6, 2
    %v478 = vld [vmem:[%s477] sm:$0x1]
    %v480 = vlaneseq
    %v481 = vshrl.u32 %v480, 7
    %v482 = vsub.s32 0, %v481
    %v483 = vrot.slane %v476, %v482
    %486 = vrot.lane.b32.xlu0 %v462, 93
    %v487 = vpop.permute.xlu0 %486
    %v488 = vsel %vm146, %v487, 0
    %v491 = vsel %vm150, %v468, 0
    %493 = vmatprep.subr.mxu0 0.0
    %494 = vmatpush1.msra.mxu0 0.0
    %495 = vmatprep.subr.mxu0 0.0
    %496 = vmatpush1.msra.mxu0 0.0
    %497 = vmatprep.subr.mxu0 0.0
    %498 = vmatpush1.msra.mxu0 0.0
    %499 = vmatprep.subr.mxu0 0.0
    %500 = vmatpush1.msra.mxu0 0.0
    %501 = vmatprep.subr.mxu0 0.0
    %502 = vmatpush1.msra.mxu0 0.0
    %503 = vmatprep.subr.mxu0 0.0
    %504 = vmatpush1.msra.mxu0 0.0
    %505 = vmatprep.subr.mxu0 0.0
    %506 = vmatpush1.msra.mxu0 0.0
    %507 = vmatprep.subr.mxu0 0.0
    %508 = vmatpush1.msra.mxu0 0.0
    %509 = vmatprep.subr.mxu0 0.0
    %510 = vmatpush1.msra.mxu0 0.0
    %511 = vmatprep.subr.mxu0 0.0
    %512 = vmatpush1.msra.mxu0 0.0
    %513 = vmatprep.subr.mxu0 0.0
    %514 = vmatpush1.msra.mxu0 0.0
    %515 = vmatprep.subr.mxu0 0.0
    %516 = vmatpush1.msra.mxu0 %v491
    %517 = vmatprep.subr.mxu0 0.0
    %518 = vmatpush1.msra.mxu0 %v467
    %519 = vmatprep.subr.mxu0 0.0
    %520 = vmatpush1.msra.mxu0 %v466
    %521 = vmatprep.subr.mxu0 0.0
    %522 = vmatpush1.msra.mxu0 %v465
    %523 = vmatprep.subr.mxu0 0.0
    %524 = vmatpush1.msra.mxu0 %v464
    %525 = vmatprep.subr.mxu0 0.0
    %526 = vmatpush2.msra.mxu0 0.0
    %527 = vmatprep.subr.mxu0 0.0
    %528 = vmatpush2.msra.mxu0 0.0
    %529 = vmatprep.subr.mxu0 0.0
    %530 = vmatpush2.msra.mxu0 0.0
    %531 = vmatprep.subr.mxu0 0.0
    %532 = vmatpush2.msra.mxu0 0.0
    %533 = vmatprep.subr.mxu0 0.0
    %534 = vmatpush2.msra.mxu0 0.0
    %535 = vmatprep.subr.mxu0 0.0
    %536 = vmatpush2.msra.mxu0 0.0
    %537 = vmatprep.subr.mxu0 0.0
    %538 = vmatpush2.msra.mxu0 0.0
    %539 = vmatprep.subr.mxu0 0.0
    %540 = vmatpush2.msra.mxu0 0.0
    %541 = vmatprep.subr.mxu0 0.0
    %542 = vmatpush2.msra.mxu0 0.0
    %543 = vmatprep.subr.mxu0 0.0
    %544 = vmatpush2.msra.mxu0 0.0
    %545 = vmatprep.subr.mxu0 0.0
    %546 = vmatpush2.msra.mxu0 0.0
    %547 = vmatprep.subr.mxu0 0.0
    %548 = vmatpush2.msra.mxu0 0.0
    %549 = vmatprep.subr.mxu0 0.0
    %550 = vmatpush2.msra.mxu0 0.0
    %551 = vmatprep.subr.mxu0 0.0
    %552 = vmatpush2.msra.mxu0 0.0
    %553 = vmatprep.subr.mxu0 0.0
    %554 = vmatpush2.msra.mxu0 0.0
    %555 = vmatprep.subr.mxu0 0.0
    %556 = vmatpush2.msra.mxu0 0.0
    %557 = vmatprep.mubr.f32.mxu0 0.0
    %558 = vmatmul.mubr.f32.gmra.mxu0 %v488
    %v559 = vpop.f32.mrf.mxu0
    %v560 = vadd.f32 %v483, %v559
    %v561 = vpop.f32.mrf.mxu0
    %562 = vdwg.mxu0
    %v564 = vlaneseq
    %v565 = vshrl.u32 %v564, 7
    %v566 = vsub.s32 0, %v565
    %v567 = vrot.slane %v478, %v566
    %v570 = vsel %vm146, %v47, 0
    %v573 = vsel %vm150, %v474, 0
    %575 = vmatprep.subr.mxu0 0.0
    %576 = vmatpush1.msra.mxu0 0.0
    %577 = vmatprep.subr.mxu0 0.0
    %578 = vmatpush1.msra.mxu0 0.0
    %579 = vmatprep.subr.mxu0 0.0
    %580 = vmatpush1.msra.mxu0 0.0
    %581 = vmatprep.subr.mxu0 0.0
    %582 = vmatpush1.msra.mxu0 0.0
    %583 = vmatprep.subr.mxu0 0.0
    %584 = vmatpush1.msra.mxu0 0.0
    %585 = vmatprep.subr.mxu0 0.0
    %586 = vmatpush1.msra.mxu0 0.0
    %587 = vmatprep.subr.mxu0 0.0
    %588 = vmatpush1.msra.mxu0 0.0
    %589 = vmatprep.subr.mxu0 0.0
    %590 = vmatpush1.msra.mxu0 0.0
    %591 = vmatprep.subr.mxu0 0.0
    %592 = vmatpush1.msra.mxu0 0.0
    %593 = vmatprep.subr.mxu0 0.0
    %594 = vmatpush1.msra.mxu0 0.0
    %595 = vmatprep.subr.mxu0 0.0
    %596 = vmatpush1.msra.mxu0 0.0
    %597 = vmatprep.subr.mxu0 0.0
    %598 = vmatpush1.msra.mxu0 %v573
    %599 = vmatprep.subr.mxu0 0.0
    %600 = vmatpush1.msra.mxu0 %v473
    %601 = vmatprep.subr.mxu0 0.0
    %602 = vmatpush1.msra.mxu0 %v472
    %603 = vmatprep.subr.mxu0 0.0
    %604 = vmatpush1.msra.mxu0 %v471
    %605 = vmatprep.subr.mxu0 0.0
    %606 = vmatpush1.msra.mxu0 %v470
    %607 = vmatprep.subr.mxu0 0.0
    %608 = vmatpush2.msra.mxu0 0.0
    %609 = vmatprep.subr.mxu0 0.0
    %610 = vmatpush2.msra.mxu0 0.0
    %611 = vmatprep.subr.mxu0 0.0
    %612 = vmatpush2.msra.mxu0 0.0
    %613 = vmatprep.subr.mxu0 0.0
    %614 = vmatpush2.msra.mxu0 0.0
    %615 = vmatprep.subr.mxu0 0.0
    %616 = vmatpush2.msra.mxu0 0.0
    %617 = vmatprep.subr.mxu0 0.0
    %618 = vmatpush2.msra.mxu0 0.0
    %619 = vmatprep.subr.mxu0 0.0
    %620 = vmatpush2.msra.mxu0 0.0
    %621 = vmatprep.subr.mxu0 0.0
    %622 = vmatpush2.msra.mxu0 0.0
    %623 = vmatprep.subr.mxu0 0.0
    %624 = vmatpush2.msra.mxu0 0.0
    %625 = vmatprep.subr.mxu0 0.0
    %626 = vmatpush2.msra.mxu0 0.0
    %627 = vmatprep.subr.mxu0 0.0
    %628 = vmatpush2.msra.mxu0 0.0
    %629 = vmatprep.subr.mxu0 0.0
    %630 = vmatpush2.msra.mxu0 0.0
    %631 = vmatprep.subr.mxu0 0.0
    %632 = vmatpush2.msra.mxu0 0.0
    %633 = vmatprep.subr.mxu0 0.0
    %634 = vmatpush2.msra.mxu0 0.0
    %635 = vmatprep.subr.mxu0 0.0
    %636 = vmatpush2.msra.mxu0 0.0
    %637 = vmatprep.subr.mxu0 0.0
    %638 = vmatpush2.msra.mxu0 0.0
    %639 = vmatprep.mubr.f32.mxu0 0.0
    %640 = vmatmul.mubr.f32.gmra.mxu0 %v570
    %v641 = vpop.f32.mrf.mxu0
    %v642 = vadd.f32 %v567, %v641
    %v643 = vpop.f32.mrf.mxu0
    %644 = vdwg.mxu0
    %v645 = vadd.f32 %v560, %v642
    %v646 = vxor.u32 %v645, 2147483648
    %v647 = vmul.f32 %v646, 1.442695
    %v648 = vpow.pop %v647
    %v649 = vadd.f32 %v648, 1.0
    %v650 = vrcp.pop %v649
    %v651 = vmul.f32 1.0, %v650
    %653 = vrot.lane.b32.xlu0 %v642, 58
    %v654 = vpop.permute.xlu0 %653
    %v656 = vmul.f32 %v651, %v654
    %658 = vrot.lane.b32.xlu0 %v656, 70
    %v659 = vpop.permute.xlu0 %658
    %v661 = vadd.f32 %v560, %v659
    %v662 = vtanh.pop %v661
    %v663 = vsub.f32 1.0, %v651
    %665 = vrot.lane.b32.xlu0 %v662, 93
    %v666 = vpop.permute.xlu0 %665
    %v668 = vmul.f32 %v663, %v666
    %669 = vrot.lane.b32.xlu0 %v47, 35
    %v670 = vpop.permute.xlu0 %669
    %v672 = vmul.f32 %v651, %v670
    %v673 = vadd.f32 %v668, %v672
    %675 = vrot.lane.b32.xlu0 %v673, 93
    %v676 = vpop.permute.xlu0 %675
    %s678 = scalar_lea.vmem [#allocation2], %s49
    %vm679 = vcmask 279552
    %680 = vst.msk [vmem:[%s678] sm:$0x3] %vm679, %v676
    %s681 = sadd.s32 %s48, 1
    %s682 = smul.u32 %s681, 2
    %s683 = scalar_lea.vmem %s0, %s682
    %v684 = vld [vmem:[%s683] sm:$0x3]
    %v685 = vld [vmem:[%s2] sm:$0xff]
    %v686 = vld [vmem:[%s4] sm:$0xff]
    %v687 = vld [vmem:[%s4 + $0x8] sm:$0xff]
    %v688 = vld [vmem:[%s4 + $0x10] sm:$0xff]
    %v689 = vld [vmem:[%s4 + $0x18] sm:$0xff]
    %v690 = vld [vmem:[%s4 + $0x20] sm:$0x7]
    %v691 = vld [vmem:[%s5] sm:$0x1]
    %v692 = vld [vmem:[%s6] sm:$0x1]
    %v694 = vlaneseq
    %v695 = vshrl.u32 %v694, 7
    %v696 = vsub.s32 0, %v695
    %v697 = vrot.slane %v691, %v696
    %v700 = vsel %vm66, %v684, 0
    %702 = vmatprep.subr.mxu0 0.0
    %703 = vmatpush1.msra.mxu0 0.0
    %704 = vmatprep.subr.mxu0 0.0
    %705 = vmatpush1.msra.mxu0 0.0
    %706 = vmatprep.subr.mxu0 0.0
    %707 = vmatpush1.msra.mxu0 0.0
    %708 = vmatprep.subr.mxu0 0.0
    %709 = vmatpush1.msra.mxu0 0.0
    %710 = vmatprep.subr.mxu0 0.0
    %711 = vmatpush1.msra.mxu0 0.0
    %712 = vmatprep.subr.mxu0 0.0
    %713 = vmatpush1.msra.mxu0 0.0
    %714 = vmatprep.subr.mxu0 0.0
    %715 = vmatpush1.msra.mxu0 0.0
    %716 = vmatprep.subr.mxu0 0.0
    %717 = vmatpush1.msra.mxu0 0.0
    %718 = vmatprep.subr.mxu0 0.0
    %719 = vmatpush1.msra.mxu0 0.0
    %720 = vmatprep.subr.mxu0 0.0
    %721 = vmatpush1.msra.mxu0 0.0
    %722 = vmatprep.subr.mxu0 0.0
    %723 = vmatpush1.msra.mxu0 0.0
    %724 = vmatprep.subr.mxu0 0.0
    %725 = vmatpush1.msra.mxu0 0.0
    %726 = vmatprep.subr.mxu0 0.0
    %727 = vmatpush1.msra.mxu0 0.0
    %728 = vmatprep.subr.mxu0 0.0
    %729 = vmatpush1.msra.mxu0 0.0
    %730 = vmatprep.subr.mxu0 0.0
    %731 = vmatpush1.msra.mxu0 0.0
    %732 = vmatprep.subr.mxu0 0.0
    %733 = vmatpush1.msra.mxu0 %v685
    %734 = vmatprep.subr.mxu0 0.0
    %735 = vmatpush2.msra.mxu0 0.0
    %736 = vmatprep.subr.mxu0 0.0
    %737 = vmatpush2.msra.mxu0 0.0
    %738 = vmatprep.subr.mxu0 0.0
    %739 = vmatpush2.msra.mxu0 0.0
    %740 = vmatprep.subr.mxu0 0.0
    %741 = vmatpush2.msra.mxu0 0.0
    %742 = vmatprep.subr.mxu0 0.0
    %743 = vmatpush2.msra.mxu0 0.0
    %744 = vmatprep.subr.mxu0 0.0
    %745 = vmatpush2.msra.mxu0 0.0
    %746 = vmatprep.subr.mxu0 0.0
    %747 = vmatpush2.msra.mxu0 0.0
    %748 = vmatprep.subr.mxu0 0.0
    %749 = vmatpush2.msra.mxu0 0.0
    %750 = vmatprep.subr.mxu0 0.0
    %751 = vmatpush2.msra.mxu0 0.0
    %752 = vmatprep.subr.mxu0 0.0
    %753 = vmatpush2.msra.mxu0 0.0
    %754 = vmatprep.subr.mxu0 0.0
    %755 = vmatpush2.msra.mxu0 0.0
    %756 = vmatprep.subr.mxu0 0.0
    %757 = vmatpush2.msra.mxu0 0.0
    %758 = vmatprep.subr.mxu0 0.0
    %759 = vmatpush2.msra.mxu0 0.0
    %760 = vmatprep.subr.mxu0 0.0
    %761 = vmatpush2.msra.mxu0 0.0
    %762 = vmatprep.subr.mxu0 0.0
    %763 = vmatpush2.msra.mxu0 0.0
    %764 = vmatprep.subr.mxu0 0.0
    %765 = vmatpush2.msra.mxu0 0.0
    %766 = vmatprep.mubr.f32.mxu0 0.0
    %767 = vmatmul.mubr.f32.gmra.mxu0 %v700
    %v768 = vpop.f32.mrf.mxu0
    %v769 = vadd.f32 %v697, %v768
    %v770 = vpop.f32.mrf.mxu0
    %771 = vdwg.mxu0
    %v773 = vlaneseq
    %v774 = vshrl.u32 %v773, 7
    %v775 = vsub.s32 0, %v774
    %v776 = vrot.slane %v692, %v775
    %v779 = vsel %vm150, %v690, 0
    %781 = vmatprep.subr.mxu0 0.0
    %782 = vmatpush1.msra.mxu0 0.0
    %783 = vmatprep.subr.mxu0 0.0
    %784 = vmatpush1.msra.mxu0 0.0
    %785 = vmatprep.subr.mxu0 0.0
    %786 = vmatpush1.msra.mxu0 0.0
    %787 = vmatprep.subr.mxu0 0.0
    %788 = vmatpush1.msra.mxu0 0.0
    %789 = vmatprep.subr.mxu0 0.0
    %790 = vmatpush1.msra.mxu0 0.0
    %791 = vmatprep.subr.mxu0 0.0
    %792 = vmatpush1.msra.mxu0 0.0
    %793 = vmatprep.subr.mxu0 0.0
    %794 = vmatpush1.msra.mxu0 0.0
    %795 = vmatprep.subr.mxu0 0.0
    %796 = vmatpush1.msra.mxu0 0.0
    %797 = vmatprep.subr.mxu0 0.0
    %798 = vmatpush1.msra.mxu0 0.0
    %799 = vmatprep.subr.mxu0 0.0
    %800 = vmatpush1.msra.mxu0 0.0
    %801 = vmatprep.subr.mxu0 0.0
    %802 = vmatpush1.msra.mxu0 0.0
    %803 = vmatprep.subr.mxu0 0.0
    %804 = vmatpush1.msra.mxu0 %v779
    %805 = vmatprep.subr.mxu0 0.0
    %806 = vmatpush1.msra.mxu0 %v689
    %807 = vmatprep.subr.mxu0 0.0
    %808 = vmatpush1.msra.mxu0 %v688
    %809 = vmatprep.subr.mxu0 0.0
    %810 = vmatpush1.msra.mxu0 %v687
    %811 = vmatprep.subr.mxu0 0.0
    %812 = vmatpush1.msra.mxu0 %v686
    %813 = vmatprep.subr.mxu0 0.0
    %814 = vmatpush2.msra.mxu0 0.0
    %815 = vmatprep.subr.mxu0 0.0
    %816 = vmatpush2.msra.mxu0 0.0
    %817 = vmatprep.subr.mxu0 0.0
    %818 = vmatpush2.msra.mxu0 0.0
    %819 = vmatprep.subr.mxu0 0.0
    %820 = vmatpush2.msra.mxu0 0.0
    %821 = vmatprep.subr.mxu0 0.0
    %822 = vmatpush2.msra.mxu0 0.0
    %823 = vmatprep.subr.mxu0 0.0
    %824 = vmatpush2.msra.mxu0 0.0
    %825 = vmatprep.subr.mxu0 0.0
    %826 = vmatpush2.msra.mxu0 0.0
    %827 = vmatprep.subr.mxu0 0.0
    %828 = vmatpush2.msra.mxu0 0.0
    %829 = vmatprep.subr.mxu0 0.0
    %830 = vmatpush2.msra.mxu0 0.0
    %831 = vmatprep.subr.mxu0 0.0
    %832 = vmatpush2.msra.mxu0 0.0
    %833 = vmatprep.subr.mxu0 0.0
    %834 = vmatpush2.msra.mxu0 0.0
    %835 = vmatprep.subr.mxu0 0.0
    %836 = vmatpush2.msra.mxu0 0.0
    %837 = vmatprep.subr.mxu0 0.0
    %838 = vmatpush2.msra.mxu0 0.0
    %839 = vmatprep.subr.mxu0 0.0
    %840 = vmatpush2.msra.mxu0 0.0
    %841 = vmatprep.subr.mxu0 0.0
    %842 = vmatpush2.msra.mxu0 0.0
    %843 = vmatprep.subr.mxu0 0.0
    %844 = vmatpush2.msra.mxu0 0.0
    %845 = vmatprep.mubr.f32.mxu0 0.0
    %846 = vmatmul.mubr.f32.gmra.mxu0 %v277
    %v847 = vpop.f32.mrf.mxu0
    %v848 = vadd.f32 %v776, %v847
    %v849 = vpop.f32.mrf.mxu0
    %850 = vdwg.mxu0
    %v851 = vadd.f32 %v769, %v848
    %v852 = vxor.u32 %v851, 2147483648
    %v853 = vmul.f32 %v852, 1.442695
    %v854 = vpow.pop %v853
    %v855 = vadd.f32 %v854, 1.0
    %v856 = vrcp.pop %v855
    %v857 = vmul.f32 1.0, %v856
    %859 = vrot.lane.b32.xlu0 %v848, 58
    %v860 = vpop.permute.xlu0 %859
    %v862 = vmul.f32 %v857, %v860
    %864 = vrot.lane.b32.xlu0 %v862, 70
    %v865 = vpop.permute.xlu0 %864
    %v867 = vadd.f32 %v769, %v865
    %v868 = vtanh.pop %v867
    %v869 = vsub.f32 1.0, %v857
    %871 = vrot.lane.b32.xlu0 %v868, 93
    %v872 = vpop.permute.xlu0 %871
    %v874 = vmul.f32 %v869, %v872
    %v875 = vmul.f32 %v857, %v252
    %v876 = vadd.f32 %v874, %v875
    %v877 = vld [vmem:[%s3] sm:$0xff]
    %v878 = vld [vmem:[%s3 + $0x8] sm:$0xff]
    %v879 = vld [vmem:[%s3 + $0x10] sm:$0xff]
    %v880 = vld [vmem:[%s3 + $0x18] sm:$0xff]
    %v881 = vld [vmem:[%s3 + $0x20] sm:$0x7]
    %v882 = vld [vmem:[%s258] sm:$0xff]
    %v883 = vld [vmem:[%s258 + $0x8] sm:$0xff]
    %v884 = vld [vmem:[%s258 + $0x10] sm:$0xff]
    %v885 = vld [vmem:[%s258 + $0x18] sm:$0xff]
    %v886 = vld [vmem:[%s258 + $0x20] sm:$0x7]
    %v887 = vld [vmem:[%s264] sm:$0x1]
    %v888 = vld [vmem:[%s266] sm:$0x1]
    %v890 = vlaneseq
    %v891 = vshrl.u32 %v890, 7
    %v892 = vsub.s32 0, %v891
    %v893 = vrot.slane %v887, %v892
    %896 = vrot.lane.b32.xlu0 %v876, 93
    %v897 = vpop.permute.xlu0 %896
    %v898 = vsel %vm146, %v897, 0
    %v901 = vsel %vm150, %v881, 0
    %903 = vmatprep.subr.mxu0 0.0
    %904 = vmatpush1.msra.mxu0 0.0
    %905 = vmatprep.subr.mxu0 0.0
    %906 = vmatpush1.msra.mxu0 0.0
    %907 = vmatprep.subr.mxu0 0.0
    %908 = vmatpush1.msra.mxu0 0.0
    %909 = vmatprep.subr.mxu0 0.0
    %910 = vmatpush1.msra.mxu0 0.0
    %911 = vmatprep.subr.mxu0 0.0
    %912 = vmatpush1.msra.mxu0 0.0
    %913 = vmatprep.subr.mxu0 0.0
    %914 = vmatpush1.msra.mxu0 0.0
    %915 = vmatprep.subr.mxu0 0.0
    %916 = vmatpush1.msra.mxu0 0.0
    %917 = vmatprep.subr.mxu0 0.0
    %918 = vmatpush1.msra.mxu0 0.0
    %919 = vmatprep.subr.mxu0 0.0
    %920 = vmatpush1.msra.mxu0 0.0
    %921 = vmatprep.subr.mxu0 0.0
    %922 = vmatpush1.msra.mxu0 0.0
    %923 = vmatprep.subr.mxu0 0.0
    %924 = vmatpush1.msra.mxu0 0.0
    %925 = vmatprep.subr.mxu0 0.0
    %926 = vmatpush1.msra.mxu0 %v901
    %927 = vmatprep.subr.mxu0 0.0
    %928 = vmatpush1.msra.mxu0 %v880
    %929 = vmatprep.subr.mxu0 0.0
    %930 = vmatpush1.msra.mxu0 %v879
    %931 = vmatprep.subr.mxu0 0.0
    %932 = vmatpush1.msra.mxu0 %v878
    %933 = vmatprep.subr.mxu0 0.0
    %934 = vmatpush1.msra.mxu0 %v877
    %935 = vmatprep.subr.mxu0 0.0
    %936 = vmatpush2.msra.mxu0 0.0
    %937 = vmatprep.subr.mxu0 0.0
    %938 = vmatpush2.msra.mxu0 0.0
    %939 = vmatprep.subr.mxu0 0.0
    %940 = vmatpush2.msra.mxu0 0.0
    %941 = vmatprep.subr.mxu0 0.0
    %942 = vmatpush2.msra.mxu0 0.0
    %943 = vmatprep.subr.mxu0 0.0
    %944 = vmatpush2.msra.mxu0 0.0
    %945 = vmatprep.subr.mxu0 0.0
    %946 = vmatpush2.msra.mxu0 0.0
    %947 = vmatprep.subr.mxu0 0.0
    %948 = vmatpush2.msra.mxu0 0.0
    %949 = vmatprep.subr.mxu0 0.0
    %950 = vmatpush2.msra.mxu0 0.0
    %951 = vmatprep.subr.mxu0 0.0
    %952 = vmatpush2.msra.mxu0 0.0
    %953 = vmatprep.subr.mxu0 0.0
    %954 = vmatpush2.msra.mxu0 0.0
    %955 = vmatprep.subr.mxu0 0.0
    %956 = vmatpush2.msra.mxu0 0.0
    %957 = vmatprep.subr.mxu0 0.0
    %958 = vmatpush2.msra.mxu0 0.0
    %959 = vmatprep.subr.mxu0 0.0
    %960 = vmatpush2.msra.mxu0 0.0
    %961 = vmatprep.subr.mxu0 0.0
    %962 = vmatpush2.msra.mxu0 0.0
    %963 = vmatprep.subr.mxu0 0.0
    %964 = vmatpush2.msra.mxu0 0.0
    %965 = vmatprep.subr.mxu0 0.0
    %966 = vmatpush2.msra.mxu0 0.0
    %967 = vmatprep.mubr.f32.mxu0 0.0
    %968 = vmatmul.mubr.f32.gmra.mxu0 %v898
    %v969 = vpop.f32.mrf.mxu0
    %v970 = vadd.f32 %v893, %v969
    %v971 = vpop.f32.mrf.mxu0
    %972 = vdwg.mxu0
    %v974 = vlaneseq
    %v975 = vshrl.u32 %v974, 7
    %v976 = vsub.s32 0, %v975
    %v977 = vrot.slane %v888, %v976
    %v980 = vsel %vm150, %v886, 0
    %982 = vmatprep.subr.mxu0 0.0
    %983 = vmatpush1.msra.mxu0 0.0
    %984 = vmatprep.subr.mxu0 0.0
    %985 = vmatpush1.msra.mxu0 0.0
    %986 = vmatprep.subr.mxu0 0.0
    %987 = vmatpush1.msra.mxu0 0.0
    %988 = vmatprep.subr.mxu0 0.0
    %989 = vmatpush1.msra.mxu0 0.0
    %990 = vmatprep.subr.mxu0 0.0
    %991 = vmatpush1.msra.mxu0 0.0
    %992 = vmatprep.subr.mxu0 0.0
    %993 = vmatpush1.msra.mxu0 0.0
    %994 = vmatprep.subr.mxu0 0.0
    %995 = vmatpush1.msra.mxu0 0.0
    %996 = vmatprep.subr.mxu0 0.0
    %997 = vmatpush1.msra.mxu0 0.0
    %998 = vmatprep.subr.mxu0 0.0
    %999 = vmatpush1.msra.mxu0 0.0
    %1000 = vmatprep.subr.mxu0 0.0
    %1001 = vmatpush1.msra.mxu0 0.0
    %1002 = vmatprep.subr.mxu0 0.0
    %1003 = vmatpush1.msra.mxu0 0.0
    %1004 = vmatprep.subr.mxu0 0.0
    %1005 = vmatpush1.msra.mxu0 %v980
    %1006 = vmatprep.subr.mxu0 0.0
    %1007 = vmatpush1.msra.mxu0 %v885
    %1008 = vmatprep.subr.mxu0 0.0
    %1009 = vmatpush1.msra.mxu0 %v884
    %1010 = vmatprep.subr.mxu0 0.0
    %1011 = vmatpush1.msra.mxu0 %v883
    %1012 = vmatprep.subr.mxu0 0.0
    %1013 = vmatpush1.msra.mxu0 %v882
    %1014 = vmatprep.subr.mxu0 0.0
    %1015 = vmatpush2.msra.mxu0 0.0
    %1016 = vmatprep.subr.mxu0 0.0
    %1017 = vmatpush2.msra.mxu0 0.0
    %1018 = vmatprep.subr.mxu0 0.0
    %1019 = vmatpush2.msra.mxu0 0.0
    %1020 = vmatprep.subr.mxu0 0.0
    %1021 = vmatpush2.msra.mxu0 0.0
    %1022 = vmatprep.subr.mxu0 0.0
    %1023 = vmatpush2.msra.mxu0 0.0
    %1024 = vmatprep.subr.mxu0 0.0
    %1025 = vmatpush2.msra.mxu0 0.0
    %1026 = vmatprep.subr.mxu0 0.0
    %1027 = vmatpush2.msra.mxu0 0.0
    %1028 = vmatprep.subr.mxu0 0.0
    %1029 = vmatpush2.msra.mxu0 0.0
    %1030 = vmatprep.subr.mxu0 0.0
    %1031 = vmatpush2.msra.mxu0 0.0
    %1032 = vmatprep.subr.mxu0 0.0
    %1033 = vmatpush2.msra.mxu0 0.0
    %1034 = vmatprep.subr.mxu0 0.0
    %1035 = vmatpush2.msra.mxu0 0.0
    %1036 = vmatprep.subr.mxu0 0.0
    %1037 = vmatpush2.msra.mxu0 0.0
    %1038 = vmatprep.subr.mxu0 0.0
    %1039 = vmatpush2.msra.mxu0 0.0
    %1040 = vmatprep.subr.mxu0 0.0
    %1041 = vmatpush2.msra.mxu0 0.0
    %1042 = vmatprep.subr.mxu0 0.0
    %1043 = vmatpush2.msra.mxu0 0.0
    %1044 = vmatprep.subr.mxu0 0.0
    %1045 = vmatpush2.msra.mxu0 0.0
    %1046 = vmatprep.mubr.f32.mxu0 0.0
    %1047 = vmatmul.mubr.f32.gmra.mxu0 %v488
    %v1048 = vpop.f32.mrf.mxu0
    %v1049 = vadd.f32 %v977, %v1048
    %v1050 = vpop.f32.mrf.mxu0
    %1051 = vdwg.mxu0
    %v1052 = vadd.f32 %v970, %v1049
    %v1053 = vxor.u32 %v1052, 2147483648
    %v1054 = vmul.f32 %v1053, 1.442695
    %v1055 = vpow.pop %v1054
    %v1056 = vadd.f32 %v1055, 1.0
    %v1057 = vrcp.pop %v1056
    %v1058 = vmul.f32 1.0, %v1057
    %1060 = vrot.lane.b32.xlu0 %v1049, 58
    %v1061 = vpop.permute.xlu0 %1060
    %v1063 = vmul.f32 %v1058, %v1061
    %1065 = vrot.lane.b32.xlu0 %v1063, 70
    %v1066 = vpop.permute.xlu0 %1065
    %v1068 = vadd.f32 %v970, %v1066
    %v1069 = vtanh.pop %v1068
    %v1070 = vsub.f32 1.0, %v1058
    %1072 = vrot.lane.b32.xlu0 %v1069, 93
    %v1073 = vpop.permute.xlu0 %1072
    %v1075 = vmul.f32 %v1070, %v1073
    %v1076 = vmul.f32 %v1058, %v462
    %v1077 = vadd.f32 %v1075, %v1076
    %v1078 = vld [vmem:[%s463] sm:$0xff]
    %v1079 = vld [vmem:[%s463 + $0x8] sm:$0xff]
    %v1080 = vld [vmem:[%s463 + $0x10] sm:$0xff]
    %v1081 = vld [vmem:[%s463 + $0x18] sm:$0xff]
    %v1082 = vld [vmem:[%s463 + $0x20] sm:$0x7]
    %v1083 = vld [vmem:[%s469] sm:$0xff]
    %v1084 = vld [vmem:[%s469 + $0x8] sm:$0xff]
    %v1085 = vld [vmem:[%s469 + $0x10] sm:$0xff]
    %v1086 = vld [vmem:[%s469 + $0x18] sm:$0xff]
    %v1087 = vld [vmem:[%s469 + $0x20] sm:$0x7]
    %v1088 = vld [vmem:[%s475] sm:$0x1]
    %v1089 = vld [vmem:[%s477] sm:$0x1]
    %v1091 = vlaneseq
    %v1092 = vshrl.u32 %v1091, 7
    %v1093 = vsub.s32 0, %v1092
    %v1094 = vrot.slane %v1088, %v1093
    %1097 = vrot.lane.b32.xlu0 %v1077, 93
    %v1098 = vpop.permute.xlu0 %1097
    %v1099 = vsel %vm146, %v1098, 0
    %v1102 = vsel %vm150, %v1082, 0
    %1104 = vmatprep.subr.mxu0 0.0
    %1105 = vmatpush1.msra.mxu0 0.0
    %1106 = vmatprep.subr.mxu0 0.0
    %1107 = vmatpush1.msra.mxu0 0.0
    %1108 = vmatprep.subr.mxu0 0.0
    %1109 = vmatpush1.msra.mxu0 0.0
    %1110 = vmatprep.subr.mxu0 0.0
    %1111 = vmatpush1.msra.mxu0 0.0
    %1112 = vmatprep.subr.mxu0 0.0
    %1113 = vmatpush1.msra.mxu0 0.0
    %1114 = vmatprep.subr.mxu0 0.0
    %1115 = vmatpush1.msra.mxu0 0.0
    %1116 = vmatprep.subr.mxu0 0.0
    %1117 = vmatpush1.msra.mxu0 0.0
    %1118 = vmatprep.subr.mxu0 0.0
    %1119 = vmatpush1.msra.mxu0 0.0
    %1120 = vmatprep.subr.mxu0 0.0
    %1121 = vmatpush1.msra.mxu0 0.0
    %1122 = vmatprep.subr.mxu0 0.0
    %1123 = vmatpush1.msra.mxu0 0.0
    %1124 = vmatprep.subr.mxu0 0.0
    %1125 = vmatpush1.msra.mxu0 0.0
    %1126 = vmatprep.subr.mxu0 0.0
    %1127 = vmatpush1.msra.mxu0 %v1102
    %1128 = vmatprep.subr.mxu0 0.0
    %1129 = vmatpush1.msra.mxu0 %v1081
    %1130 = vmatprep.subr.mxu0 0.0
    %1131 = vmatpush1.msra.mxu0 %v1080
    %1132 = vmatprep.subr.mxu0 0.0
    %1133 = vmatpush1.msra.mxu0 %v1079
    %1134 = vmatprep.subr.mxu0 0.0
    %1135 = vmatpush1.msra.mxu0 %v1078
    %1136 = vmatprep.subr.mxu0 0.0
    %1137 = vmatpush2.msra.mxu0 0.0
    %1138 = vmatprep.subr.mxu0 0.0
    %1139 = vmatpush2.msra.mxu0 0.0
    %1140 = vmatprep.subr.mxu0 0.0
    %1141 = vmatpush2.msra.mxu0 0.0
    %1142 = vmatprep.subr.mxu0 0.0
    %1143 = vmatpush2.msra.mxu0 0.0
    %1144 = vmatprep.subr.mxu0 0.0
    %1145 = vmatpush2.msra.mxu0 0.0
    %1146 = vmatprep.subr.mxu0 0.0
    %1147 = vmatpush2.msra.mxu0 0.0
    %1148 = vmatprep.subr.mxu0 0.0
    %1149 = vmatpush2.msra.mxu0 0.0
    %1150 = vmatprep.subr.mxu0 0.0
    %1151 = vmatpush2.msra.mxu0 0.0
    %1152 = vmatprep.subr.mxu0 0.0
    %1153 = vmatpush2.msra.mxu0 0.0
    %1154 = vmatprep.subr.mxu0 0.0
    %1155 = vmatpush2.msra.mxu0 0.0
    %1156 = vmatprep.subr.mxu0 0.0
    %1157 = vmatpush2.msra.mxu0 0.0
    %1158 = vmatprep.subr.mxu0 0.0
    %1159 = vmatpush2.msra.mxu0 0.0
    %1160 = vmatprep.subr.mxu0 0.0
    %1161 = vmatpush2.msra.mxu0 0.0
    %1162 = vmatprep.subr.mxu0 0.0
    %1163 = vmatpush2.msra.mxu0 0.0
    %1164 = vmatprep.subr.mxu0 0.0
    %1165 = vmatpush2.msra.mxu0 0.0
    %1166 = vmatprep.subr.mxu0 0.0
    %1167 = vmatpush2.msra.mxu0 0.0
    %1168 = vmatprep.mubr.f32.mxu0 0.0
    %1169 = vmatmul.mubr.f32.gmra.mxu0 %v1099
    %v1170 = vpop.f32.mrf.mxu0
    %v1171 = vadd.f32 %v1094, %v1170
    %v1172 = vpop.f32.mrf.mxu0
    %1173 = vdwg.mxu0
    %v1175 = vlaneseq
    %v1176 = vshrl.u32 %v1175, 7
    %v1177 = vsub.s32 0, %v1176
    %v1178 = vrot.slane %v1089, %v1177
    %v1180 = vsel %vm146, %v676, 0
    %v1183 = vsel %vm150, %v1087, 0
    %1185 = vmatprep.subr.mxu0 0.0
    %1186 = vmatpush1.msra.mxu0 0.0
    %1187 = vmatprep.subr.mxu0 0.0
    %1188 = vmatpush1.msra.mxu0 0.0
    %1189 = vmatprep.subr.mxu0 0.0
    %1190 = vmatpush1.msra.mxu0 0.0
    %1191 = vmatprep.subr.mxu0 0.0
    %1192 = vmatpush1.msra.mxu0 0.0
    %1193 = vmatprep.subr.mxu0 0.0
    %1194 = vmatpush1.msra.mxu0 0.0
    %1195 = vmatprep.subr.mxu0 0.0
    %1196 = vmatpush1.msra.mxu0 0.0
    %1197 = vmatprep.subr.mxu0 0.0
    %1198 = vmatpush1.msra.mxu0 0.0
    %1199 = vmatprep.subr.mxu0 0.0
    %1200 = vmatpush1.msra.mxu0 0.0
    %1201 = vmatprep.subr.mxu0 0.0
    %1202 = vmatpush1.msra.mxu0 0.0
    %1203 = vmatprep.subr.mxu0 0.0
    %1204 = vmatpush1.msra.mxu0 0.0
    %1205 = vmatprep.subr.mxu0 0.0
    %1206 = vmatpush1.msra.mxu0 0.0
    %1207 = vmatprep.subr.mxu0 0.0
    %1208 = vmatpush1.msra.mxu0 %v1183
    %1209 = vmatprep.subr.mxu0 0.0
    %1210 = vmatpush1.msra.mxu0 %v1086
    %1211 = vmatprep.subr.mxu0 0.0
    %1212 = vmatpush1.msra.mxu0 %v1085
    %1213 = vmatprep.subr.mxu0 0.0
    %1214 = vmatpush1.msra.mxu0 %v1084
    %1215 = vmatprep.subr.mxu0 0.0
    %1216 = vmatpush1.msra.mxu0 %v1083
    %1217 = vmatprep.subr.mxu0 0.0
    %1218 = vmatpush2.msra.mxu0 0.0
    %1219 = vmatprep.subr.mxu0 0.0
    %1220 = vmatpush2.msra.mxu0 0.0
    %1221 = vmatprep.subr.mxu0 0.0
    %1222 = vmatpush2.msra.mxu0 0.0
    %1223 = vmatprep.subr.mxu0 0.0
    %1224 = vmatpush2.msra.mxu0 0.0
    %1225 = vmatprep.subr.mxu0 0.0
    %1226 = vmatpush2.msra.mxu0 0.0
    %1227 = vmatprep.subr.mxu0 0.0
    %1228 = vmatpush2.msra.mxu0 0.0
    %1229 = vmatprep.subr.mxu0 0.0
    %1230 = vmatpush2.msra.mxu0 0.0
    %1231 = vmatprep.subr.mxu0 0.0
    %1232 = vmatpush2.msra.mxu0 0.0
    %1233 = vmatprep.subr.mxu0 0.0
    %1234 = vmatpush2.msra.mxu0 0.0
    %1235 = vmatprep.subr.mxu0 0.0
    %1236 = vmatpush2.msra.mxu0 0.0
    %1237 = vmatprep.subr.mxu0 0.0
    %1238 = vmatpush2.msra.mxu0 0.0
    %1239 = vmatprep.subr.mxu0 0.0
    %1240 = vmatpush2.msra.mxu0 0.0
    %1241 = vmatprep.subr.mxu0 0.0
    %1242 = vmatpush2.msra.mxu0 0.0
    %1243 = vmatprep.subr.mxu0 0.0
    %1244 = vmatpush2.msra.mxu0 0.0
    %1245 = vmatprep.subr.mxu0 0.0
    %1246 = vmatpush2.msra.mxu0 0.0
    %1247 = vmatprep.subr.mxu0 0.0
    %1248 = vmatpush2.msra.mxu0 0.0
    %1249 = vmatprep.mubr.f32.mxu0 0.0
    %1250 = vmatmul.mubr.f32.gmra.mxu0 %v1180
    %v1251 = vpop.f32.mrf.mxu0
    %v1252 = vadd.f32 %v1178, %v1251
    %v1253 = vpop.f32.mrf.mxu0
    %1254 = vdwg.mxu0
    %v1255 = vadd.f32 %v1171, %v1252
    %v1256 = vxor.u32 %v1255, 2147483648
    %v1257 = vmul.f32 %v1256, 1.442695
    %v1258 = vpow.pop %v1257
    %v1259 = vadd.f32 %v1258, 1.0
    %v1260 = vrcp.pop %v1259
    %v1261 = vmul.f32 1.0, %v1260
    %1263 = vrot.lane.b32.xlu0 %v1252, 58
    %v1264 = vpop.permute.xlu0 %1263
    %v1266 = vmul.f32 %v1261, %v1264
    %1268 = vrot.lane.b32.xlu0 %v1266, 70
    %v1269 = vpop.permute.xlu0 %1268
    %v1271 = vadd.f32 %v1171, %v1269
    %v1272 = vtanh.pop %v1271
    %v1273 = vsub.f32 1.0, %v1261
    %1275 = vrot.lane.b32.xlu0 %v1272, 93
    %v1276 = vpop.permute.xlu0 %1275
    %v1278 = vmul.f32 %v1273, %v1276
    %v1279 = vmul.f32 %v1261, %v673
    %v1280 = vadd.f32 %v1278, %v1279
    %1282 = vrot.lane.b32.xlu0 %v1280, 93
    %v1283 = vpop.permute.xlu0 %1282
    %s1285 = scalar_lea.vmem [#allocation2], %s682
    %1286 = vst.msk [vmem:[%s1285] sm:$0x3] %vm679, %v1283
  $region42: #{tpu_custom_call.1} parent=0 // loop_footer
    %s44 = sadd.s32 1, %s40
  $region43: #{tpu_custom_call.1} parent=0 // loop_footer_branch
    %39 = sbr.rel target = $region39
  $region44: #{tpu_custom_call.1} parent=0 // loop_exit
    _
  %v1289 = vld [vmem:[#allocation2] sm:$0x3]
  %v1290 = vld [vmem:[#allocation2 + $0x2] sm:$0x3]
  %v1291 = vld [vmem:[#allocation2 + $0x4] sm:$0x3]
  %v1292 = vld [vmem:[#allocation2 + $0x6] sm:$0x3]
  %v1293 = vld [vmem:[#allocation2 + $0x8] sm:$0x3]
  %v1294 = vld [vmem:[#allocation2 + $0xa] sm:$0x3]
  %v1295 = vld [vmem:[#allocation2 + $0xc] sm:$0x3]
  %v1296 = vld [vmem:[#allocation2 + $0xe] sm:$0x3]
  %v1297 = vld [vmem:[#allocation2 + $0x10] sm:$0x3]
  %v1298 = vld [vmem:[#allocation2 + $0x12] sm:$0x3]
  %v1299 = vld [vmem:[#allocation2 + $0x14] sm:$0x3]
  %v1300 = vld [vmem:[#allocation2 + $0x16] sm:$0x3]
  %v1301 = vld [vmem:[#allocation2 + $0x18] sm:$0x3]
  %v1302 = vld [vmem:[#allocation2 + $0x1a] sm:$0x3]
  %v1303 = vld [vmem:[#allocation2 + $0x1c] sm:$0x3]
  %v1304 = vld [vmem:[#allocation2 + $0x1e] sm:$0x3]
  %v1305 = vld [vmem:[#allocation2 + $0x20] sm:$0x3]
  %v1306 = vld [vmem:[#allocation2 + $0x22] sm:$0x3]
  %v1307 = vld [vmem:[#allocation2 + $0x24] sm:$0x3]
  %v1308 = vld [vmem:[#allocation2 + $0x26] sm:$0x3]
  %v1309 = vld [vmem:[#allocation2 + $0x28] sm:$0x3]
  %v1310 = vld [vmem:[#allocation2 + $0x2a] sm:$0x3]
  %v1311 = vld [vmem:[#allocation2 + $0x2c] sm:$0x3]
  %v1312 = vld [vmem:[#allocation2 + $0x2e] sm:$0x3]
  %v1313 = vld [vmem:[#allocation2 + $0x30] sm:$0x3]
  %v1314 = vld [vmem:[#allocation2 + $0x32] sm:$0x3]
  %v1315 = vld [vmem:[#allocation2 + $0x34] sm:$0x3]
  %v1316 = vld [vmem:[#allocation2 + $0x36] sm:$0x3]
  %v1317 = vld [vmem:[#allocation2 + $0x38] sm:$0x3]
  %v1318 = vld [vmem:[#allocation2 + $0x3a] sm:$0x3]
  %v1319 = vld [vmem:[#allocation2 + $0x3c] sm:$0x3]
  %v1320 = vld [vmem:[#allocation2 + $0x3e] sm:$0x3]
  %v1321 = vld [vmem:[#allocation2 + $0x40] sm:$0x3]
  %v1322 = vld [vmem:[#allocation2 + $0x42] sm:$0x3]
  %v1323 = vld [vmem:[#allocation2 + $0x44] sm:$0x3]
  %v1324 = vld [vmem:[#allocation2 + $0x46] sm:$0x3]
  %v1325 = vld [vmem:[#allocation2 + $0x48] sm:$0x3]
  %v1326 = vld [vmem:[#allocation2 + $0x4a] sm:$0x3]
  %v1327 = vld [vmem:[#allocation2 + $0x4c] sm:$0x3]
  %v1328 = vld [vmem:[#allocation2 + $0x4e] sm:$0x3]
  %v1329 = vld [vmem:[#allocation2 + $0x50] sm:$0x3]
  %v1330 = vld [vmem:[#allocation2 + $0x52] sm:$0x3]
  %v1331 = vld [vmem:[#allocation2 + $0x54] sm:$0x3]
  %v1332 = vld [vmem:[#allocation2 + $0x56] sm:$0x3]
  %v1333 = vld [vmem:[#allocation2 + $0x58] sm:$0x3]
  %v1334 = vld [vmem:[#allocation2 + $0x5a] sm:$0x3]
  %v1335 = vld [vmem:[#allocation2 + $0x5c] sm:$0x3]
  %v1336 = vld [vmem:[#allocation2 + $0x5e] sm:$0x3]
  %v1337 = vld [vmem:[#allocation2 + $0x60] sm:$0x3]
  %v1338 = vld [vmem:[#allocation2 + $0x62] sm:$0x3]
  %v1339 = vld [vmem:[#allocation2 + $0x64] sm:$0x3]
  %v1340 = vld [vmem:[#allocation2 + $0x66] sm:$0x3]
  %v1341 = vld [vmem:[#allocation2 + $0x68] sm:$0x3]
  %v1342 = vld [vmem:[#allocation2 + $0x6a] sm:$0x3]
  %v1343 = vld [vmem:[#allocation2 + $0x6c] sm:$0x3]
  %v1344 = vld [vmem:[#allocation2 + $0x6e] sm:$0x3]
  %v1345 = vld [vmem:[#allocation2 + $0x70] sm:$0x3]
  %v1346 = vld [vmem:[#allocation2 + $0x72] sm:$0x3]
  %v1347 = vld [vmem:[%s7] sm:$0x1]
  %v1349 = vlaneseq
  %v1350 = vshrl.u32 %v1349, 7
  %v1351 = vsub.s32 0, %v1350
  %v1352 = vrot.slane %v1347, %v1351
  %v1354 = vmul.f32 %v1289, %v1352
  %v1355 = vmul.f32 %v1290, %v1352
  %v1356 = vmul.f32 %v1291, %v1352
  %v1357 = vmul.f32 %v1292, %v1352
  %v1358 = vmul.f32 %v1293, %v1352
  %v1359 = vmul.f32 %v1294, %v1352
  %v1360 = vmul.f32 %v1295, %v1352
  %v1361 = vmul.f32 %v1296, %v1352
  %v1362 = vmul.f32 %v1297, %v1352
  %v1363 = vmul.f32 %v1298, %v1352
  %v1364 = vmul.f32 %v1299, %v1352
  %v1365 = vmul.f32 %v1300, %v1352
  %v1366 = vmul.f32 %v1301, %v1352
  %v1367 = vmul.f32 %v1302, %v1352
  %v1368 = vmul.f32 %v1303, %v1352
  %v1369 = vmul.f32 %v1304, %v1352
  %v1370 = vmul.f32 %v1305, %v1352
  %v1371 = vmul.f32 %v1306, %v1352
  %v1372 = vmul.f32 %v1307, %v1352
  %v1373 = vmul.f32 %v1308, %v1352
  %v1374 = vmul.f32 %v1309, %v1352
  %v1375 = vmul.f32 %v1310, %v1352
  %v1376 = vmul.f32 %v1311, %v1352
  %v1377 = vmul.f32 %v1312, %v1352
  %v1378 = vmul.f32 %v1313, %v1352
  %v1379 = vmul.f32 %v1314, %v1352
  %v1380 = vmul.f32 %v1315, %v1352
  %v1381 = vmul.f32 %v1316, %v1352
  %v1382 = vmul.f32 %v1317, %v1352
  %v1383 = vmul.f32 %v1318, %v1352
  %v1384 = vmul.f32 %v1319, %v1352
  %v1385 = vmul.f32 %v1320, %v1352
  %v1386 = vmul.f32 %v1321, %v1352
  %v1387 = vmul.f32 %v1322, %v1352
  %v1388 = vmul.f32 %v1323, %v1352
  %v1389 = vmul.f32 %v1324, %v1352
  %v1390 = vmul.f32 %v1325, %v1352
  %v1391 = vmul.f32 %v1326, %v1352
  %v1392 = vmul.f32 %v1327, %v1352
  %v1393 = vmul.f32 %v1328, %v1352
  %v1394 = vmul.f32 %v1329, %v1352
  %v1395 = vmul.f32 %v1330, %v1352
  %v1396 = vmul.f32 %v1331, %v1352
  %v1397 = vmul.f32 %v1332, %v1352
  %v1398 = vmul.f32 %v1333, %v1352
  %v1399 = vmul.f32 %v1334, %v1352
  %v1400 = vmul.f32 %v1335, %v1352
  %v1401 = vmul.f32 %v1336, %v1352
  %v1402 = vmul.f32 %v1337, %v1352
  %v1403 = vmul.f32 %v1338, %v1352
  %v1404 = vmul.f32 %v1339, %v1352
  %v1405 = vmul.f32 %v1340, %v1352
  %v1406 = vmul.f32 %v1341, %v1352
  %v1407 = vmul.f32 %v1342, %v1352
  %v1408 = vmul.f32 %v1343, %v1352
  %v1409 = vmul.f32 %v1344, %v1352
  %v1410 = vmul.f32 %v1345, %v1352
  %v1411 = vmul.f32 %v1346, %v1352
  %vm1412 = vcmask 279552
  %v1413 = vsel %vm1412, %v1354, 0.0
  %1414 = vadd.xlane.f32.xlu0 %v1413
  %v1415 = vpop.xlane.xlu0 %1414
  %v1416 = vsel %vm1412, %v1355, 0.0
  %1417 = vadd.xlane.f32.xlu0 %v1416
  %v1418 = vpop.xlane.xlu0 %1417
  %v1419 = vsel %vm1412, %v1356, 0.0
  %1420 = vadd.xlane.f32.xlu0 %v1419
  %v1421 = vpop.xlane.xlu0 %1420
  %v1422 = vsel %vm1412, %v1357, 0.0
  %1423 = vadd.xlane.f32.xlu0 %v1422
  %v1424 = vpop.xlane.xlu0 %1423
  %v1425 = vsel %vm1412, %v1358, 0.0
  %1426 = vadd.xlane.f32.xlu0 %v1425
  %v1427 = vpop.xlane.xlu0 %1426
  %v1428 = vsel %vm1412, %v1359, 0.0
  %1429 = vadd.xlane.f32.xlu0 %v1428
  %v1430 = vpop.xlane.xlu0 %1429
  %v1431 = vsel %vm1412, %v1360, 0.0
  %1432 = vadd.xlane.f32.xlu0 %v1431
  %v1433 = vpop.xlane.xlu0 %1432
  %v1434 = vsel %vm1412, %v1361, 0.0
  %1435 = vadd.xlane.f32.xlu0 %v1434
  %v1436 = vpop.xlane.xlu0 %1435
  %v1437 = vsel %vm1412, %v1362, 0.0
  %1438 = vadd.xlane.f32.xlu0 %v1437
  %v1439 = vpop.xlane.xlu0 %1438
  %v1440 = vsel %vm1412, %v1363, 0.0
  %1441 = vadd.xlane.f32.xlu0 %v1440
  %v1442 = vpop.xlane.xlu0 %1441
  %v1443 = vsel %vm1412, %v1364, 0.0
  %1444 = vadd.xlane.f32.xlu0 %v1443
  %v1445 = vpop.xlane.xlu0 %1444
  %v1446 = vsel %vm1412, %v1365, 0.0
  %1447 = vadd.xlane.f32.xlu0 %v1446
  %v1448 = vpop.xlane.xlu0 %1447
  %v1449 = vsel %vm1412, %v1366, 0.0
  %1450 = vadd.xlane.f32.xlu0 %v1449
  %v1451 = vpop.xlane.xlu0 %1450
  %v1452 = vsel %vm1412, %v1367, 0.0
  %1453 = vadd.xlane.f32.xlu0 %v1452
  %v1454 = vpop.xlane.xlu0 %1453
  %v1455 = vsel %vm1412, %v1368, 0.0
  %1456 = vadd.xlane.f32.xlu0 %v1455
  %v1457 = vpop.xlane.xlu0 %1456
  %v1458 = vsel %vm1412, %v1369, 0.0
  %1459 = vadd.xlane.f32.xlu0 %v1458
  %v1460 = vpop.xlane.xlu0 %1459
  %v1461 = vsel %vm1412, %v1370, 0.0
  %1462 = vadd.xlane.f32.xlu0 %v1461
  %v1463 = vpop.xlane.xlu0 %1462
  %v1464 = vsel %vm1412, %v1371, 0.0
  %1465 = vadd.xlane.f32.xlu0 %v1464
  %v1466 = vpop.xlane.xlu0 %1465
  %v1467 = vsel %vm1412, %v1372, 0.0
  %1468 = vadd.xlane.f32.xlu0 %v1467
  %v1469 = vpop.xlane.xlu0 %1468
  %v1470 = vsel %vm1412, %v1373, 0.0
  %1471 = vadd.xlane.f32.xlu0 %v1470
  %v1472 = vpop.xlane.xlu0 %1471
  %v1473 = vsel %vm1412, %v1374, 0.0
  %1474 = vadd.xlane.f32.xlu0 %v1473
  %v1475 = vpop.xlane.xlu0 %1474
  %v1476 = vsel %vm1412, %v1375, 0.0
  %1477 = vadd.xlane.f32.xlu0 %v1476
  %v1478 = vpop.xlane.xlu0 %1477
  %v1479 = vsel %vm1412, %v1376, 0.0
  %1480 = vadd.xlane.f32.xlu0 %v1479
  %v1481 = vpop.xlane.xlu0 %1480
  %v1482 = vsel %vm1412, %v1377, 0.0
  %1483 = vadd.xlane.f32.xlu0 %v1482
  %v1484 = vpop.xlane.xlu0 %1483
  %v1485 = vsel %vm1412, %v1378, 0.0
  %1486 = vadd.xlane.f32.xlu0 %v1485
  %v1487 = vpop.xlane.xlu0 %1486
  %v1488 = vsel %vm1412, %v1379, 0.0
  %1489 = vadd.xlane.f32.xlu0 %v1488
  %v1490 = vpop.xlane.xlu0 %1489
  %v1491 = vsel %vm1412, %v1380, 0.0
  %1492 = vadd.xlane.f32.xlu0 %v1491
  %v1493 = vpop.xlane.xlu0 %1492
  %v1494 = vsel %vm1412, %v1381, 0.0
  %1495 = vadd.xlane.f32.xlu0 %v1494
  %v1496 = vpop.xlane.xlu0 %1495
  %v1497 = vsel %vm1412, %v1382, 0.0
  %1498 = vadd.xlane.f32.xlu0 %v1497
  %v1499 = vpop.xlane.xlu0 %1498
  %v1500 = vsel %vm1412, %v1383, 0.0
  %1501 = vadd.xlane.f32.xlu0 %v1500
  %v1502 = vpop.xlane.xlu0 %1501
  %v1503 = vsel %vm1412, %v1384, 0.0
  %1504 = vadd.xlane.f32.xlu0 %v1503
  %v1505 = vpop.xlane.xlu0 %1504
  %v1506 = vsel %vm1412, %v1385, 0.0
  %1507 = vadd.xlane.f32.xlu0 %v1506
  %v1508 = vpop.xlane.xlu0 %1507
  %v1509 = vsel %vm1412, %v1386, 0.0
  %1510 = vadd.xlane.f32.xlu0 %v1509
  %v1511 = vpop.xlane.xlu0 %1510
  %v1512 = vsel %vm1412, %v1387, 0.0
  %1513 = vadd.xlane.f32.xlu0 %v1512
  %v1514 = vpop.xlane.xlu0 %1513
  %v1515 = vsel %vm1412, %v1388, 0.0
  %1516 = vadd.xlane.f32.xlu0 %v1515
  %v1517 = vpop.xlane.xlu0 %1516
  %v1518 = vsel %vm1412, %v1389, 0.0
  %1519 = vadd.xlane.f32.xlu0 %v1518
  %v1520 = vpop.xlane.xlu0 %1519
  %v1521 = vsel %vm1412, %v1390, 0.0
  %1522 = vadd.xlane.f32.xlu0 %v1521
  %v1523 = vpop.xlane.xlu0 %1522
  %v1524 = vsel %vm1412, %v1391, 0.0
  %1525 = vadd.xlane.f32.xlu0 %v1524
  %v1526 = vpop.xlane.xlu0 %1525
  %v1527 = vsel %vm1412, %v1392, 0.0
  %1528 = vadd.xlane.f32.xlu0 %v1527
  %v1529 = vpop.xlane.xlu0 %1528
  %v1530 = vsel %vm1412, %v1393, 0.0
  %1531 = vadd.xlane.f32.xlu0 %v1530
  %v1532 = vpop.xlane.xlu0 %1531
  %v1533 = vsel %vm1412, %v1394, 0.0
  %1534 = vadd.xlane.f32.xlu0 %v1533
  %v1535 = vpop.xlane.xlu0 %1534
  %v1536 = vsel %vm1412, %v1395, 0.0
  %1537 = vadd.xlane.f32.xlu0 %v1536
  %v1538 = vpop.xlane.xlu0 %1537
  %v1539 = vsel %vm1412, %v1396, 0.0
  %1540 = vadd.xlane.f32.xlu0 %v1539
  %v1541 = vpop.xlane.xlu0 %1540
  %v1542 = vsel %vm1412, %v1397, 0.0
  %1543 = vadd.xlane.f32.xlu0 %v1542
  %v1544 = vpop.xlane.xlu0 %1543
  %v1545 = vsel %vm1412, %v1398, 0.0
  %1546 = vadd.xlane.f32.xlu0 %v1545
  %v1547 = vpop.xlane.xlu0 %1546
  %v1548 = vsel %vm1412, %v1399, 0.0
  %1549 = vadd.xlane.f32.xlu0 %v1548
  %v1550 = vpop.xlane.xlu0 %1549
  %v1551 = vsel %vm1412, %v1400, 0.0
  %1552 = vadd.xlane.f32.xlu0 %v1551
  %v1553 = vpop.xlane.xlu0 %1552
  %v1554 = vsel %vm1412, %v1401, 0.0
  %1555 = vadd.xlane.f32.xlu0 %v1554
  %v1556 = vpop.xlane.xlu0 %1555
  %v1557 = vsel %vm1412, %v1402, 0.0
  %1558 = vadd.xlane.f32.xlu0 %v1557
  %v1559 = vpop.xlane.xlu0 %1558
  %v1560 = vsel %vm1412, %v1403, 0.0
  %1561 = vadd.xlane.f32.xlu0 %v1560
  %v1562 = vpop.xlane.xlu0 %1561
  %v1563 = vsel %vm1412, %v1404, 0.0
  %1564 = vadd.xlane.f32.xlu0 %v1563
  %v1565 = vpop.xlane.xlu0 %1564
  %v1566 = vsel %vm1412, %v1405, 0.0
  %1567 = vadd.xlane.f32.xlu0 %v1566
  %v1568 = vpop.xlane.xlu0 %1567
  %v1569 = vsel %vm1412, %v1406, 0.0
  %1570 = vadd.xlane.f32.xlu0 %v1569
  %v1571 = vpop.xlane.xlu0 %1570
  %v1572 = vsel %vm1412, %v1407, 0.0
  %1573 = vadd.xlane.f32.xlu0 %v1572
  %v1574 = vpop.xlane.xlu0 %1573
  %v1575 = vsel %vm1412, %v1408, 0.0
  %1576 = vadd.xlane.f32.xlu0 %v1575
  %v1577 = vpop.xlane.xlu0 %1576
  %v1578 = vsel %vm1412, %v1409, 0.0
  %1579 = vadd.xlane.f32.xlu0 %v1578
  %v1580 = vpop.xlane.xlu0 %1579
  %v1581 = vsel %vm1412, %v1410, 0.0
  %1582 = vadd.xlane.f32.xlu0 %v1581
  %v1583 = vpop.xlane.xlu0 %1582
  %v1584 = vsel %vm1412, %v1411, 0.0
  %1585 = vadd.xlane.f32.xlu0 %v1584
  %v1586 = vpop.xlane.xlu0 %1585
  %v1587 = vld [vmem:[#allocation3] sm:$0x1]
  %v1589 = vlaneseq
  %v1590 = vshrl.u32 %v1589, 7
  %v1591 = vsub.s32 0, %v1590
  %v1592 = vrot.slane %v1587, %v1591
  %1593 = vset.pattern.permute.xlu0 0
  %1594 = vperm.xlu0 %1593, %v1592
  %v1595 = vpop.permute.xlu0 %1594
  %v1597 = vadd.f32 %v1415, %v1595
  %v1598 = vadd.f32 %v1418, %v1595
  %v1599 = vadd.f32 %v1421, %v1595
  %v1600 = vadd.f32 %v1424, %v1595
  %v1601 = vadd.f32 %v1427, %v1595
  %v1602 = vadd.f32 %v1430, %v1595
  %v1603 = vadd.f32 %v1433, %v1595
  %v1604 = vadd.f32 %v1436, %v1595
  %v1605 = vadd.f32 %v1439, %v1595
  %v1606 = vadd.f32 %v1442, %v1595
  %v1607 = vadd.f32 %v1445, %v1595
  %v1608 = vadd.f32 %v1448, %v1595
  %v1609 = vadd.f32 %v1451, %v1595
  %v1610 = vadd.f32 %v1454, %v1595
  %v1611 = vadd.f32 %v1457, %v1595
  %v1612 = vadd.f32 %v1460, %v1595
  %v1613 = vadd.f32 %v1463, %v1595
  %v1614 = vadd.f32 %v1466, %v1595
  %v1615 = vadd.f32 %v1469, %v1595
  %v1616 = vadd.f32 %v1472, %v1595
  %v1617 = vadd.f32 %v1475, %v1595
  %v1618 = vadd.f32 %v1478, %v1595
  %v1619 = vadd.f32 %v1481, %v1595
  %v1620 = vadd.f32 %v1484, %v1595
  %v1621 = vadd.f32 %v1487, %v1595
  %v1622 = vadd.f32 %v1490, %v1595
  %v1623 = vadd.f32 %v1493, %v1595
  %v1624 = vadd.f32 %v1496, %v1595
  %v1625 = vadd.f32 %v1499, %v1595
  %v1626 = vadd.f32 %v1502, %v1595
  %v1627 = vadd.f32 %v1505, %v1595
  %v1628 = vadd.f32 %v1508, %v1595
  %v1629 = vadd.f32 %v1511, %v1595
  %v1630 = vadd.f32 %v1514, %v1595
  %v1631 = vadd.f32 %v1517, %v1595
  %v1632 = vadd.f32 %v1520, %v1595
  %v1633 = vadd.f32 %v1523, %v1595
  %v1634 = vadd.f32 %v1526, %v1595
  %v1635 = vadd.f32 %v1529, %v1595
  %v1636 = vadd.f32 %v1532, %v1595
  %v1637 = vadd.f32 %v1535, %v1595
  %v1638 = vadd.f32 %v1538, %v1595
  %v1639 = vadd.f32 %v1541, %v1595
  %v1640 = vadd.f32 %v1544, %v1595
  %v1641 = vadd.f32 %v1547, %v1595
  %v1642 = vadd.f32 %v1550, %v1595
  %v1643 = vadd.f32 %v1553, %v1595
  %v1644 = vadd.f32 %v1556, %v1595
  %v1645 = vadd.f32 %v1559, %v1595
  %v1646 = vadd.f32 %v1562, %v1595
  %v1647 = vadd.f32 %v1565, %v1595
  %v1648 = vadd.f32 %v1568, %v1595
  %v1649 = vadd.f32 %v1571, %v1595
  %v1650 = vadd.f32 %v1574, %v1595
  %v1651 = vadd.f32 %v1577, %v1595
  %v1652 = vadd.f32 %v1580, %v1595
  %v1653 = vadd.f32 %v1583, %v1595
  %v1654 = vadd.f32 %v1586, %v1595
  %v1713 = vlaneseq
  %v1714 = vand.u32 %v1713, 127
  %v1715 = vlaneseq
  %v1716 = vshrl.u32 %v1715, 7
  %v1717 = vsub.s32 %v1714, %v1716
  %v1718 = vrot.slane %v1597, %v1717
  %v1719 = vlaneseq
  %v1720 = vshrl.u32 %v1719, 7
  %v1721 = vsub.s32 %v1714, %v1720
  %v1722 = vrot.slane %v1598, %v1721
  %v1723 = vlaneseq
  %v1724 = vshrl.u32 %v1723, 7
  %v1725 = vsub.s32 %v1714, %v1724
  %v1726 = vrot.slane %v1599, %v1725
  %v1727 = vlaneseq
  %v1728 = vshrl.u32 %v1727, 7
  %v1729 = vsub.s32 %v1714, %v1728
  %v1730 = vrot.slane %v1600, %v1729
  %v1731 = vlaneseq
  %v1732 = vshrl.u32 %v1731, 7
  %v1733 = vsub.s32 %v1714, %v1732
  %v1734 = vrot.slane %v1601, %v1733
  %v1735 = vlaneseq
  %v1736 = vshrl.u32 %v1735, 7
  %v1737 = vsub.s32 %v1714, %v1736
  %v1738 = vrot.slane %v1602, %v1737
  %v1739 = vlaneseq
  %v1740 = vshrl.u32 %v1739, 7
  %v1741 = vsub.s32 %v1714, %v1740
  %v1742 = vrot.slane %v1603, %v1741
  %v1743 = vlaneseq
  %v1744 = vshrl.u32 %v1743, 7
  %v1745 = vsub.s32 %v1714, %v1744
  %v1746 = vrot.slane %v1604, %v1745
  %v1747 = vlaneseq
  %v1748 = vshrl.u32 %v1747, 7
  %v1749 = vsub.s32 %v1714, %v1748
  %v1750 = vrot.slane %v1605, %v1749
  %v1751 = vlaneseq
  %v1752 = vshrl.u32 %v1751, 7
  %v1753 = vsub.s32 %v1714, %v1752
  %v1754 = vrot.slane %v1606, %v1753
  %v1755 = vlaneseq
  %v1756 = vshrl.u32 %v1755, 7
  %v1757 = vsub.s32 %v1714, %v1756
  %v1758 = vrot.slane %v1607, %v1757
  %v1759 = vlaneseq
  %v1760 = vshrl.u32 %v1759, 7
  %v1761 = vsub.s32 %v1714, %v1760
  %v1762 = vrot.slane %v1608, %v1761
  %v1763 = vlaneseq
  %v1764 = vshrl.u32 %v1763, 7
  %v1765 = vsub.s32 %v1714, %v1764
  %v1766 = vrot.slane %v1609, %v1765
  %v1767 = vlaneseq
  %v1768 = vshrl.u32 %v1767, 7
  %v1769 = vsub.s32 %v1714, %v1768
  %v1770 = vrot.slane %v1610, %v1769
  %v1771 = vlaneseq
  %v1772 = vshrl.u32 %v1771, 7
  %v1773 = vsub.s32 %v1714, %v1772
  %v1774 = vrot.slane %v1611, %v1773
  %v1775 = vlaneseq
  %v1776 = vshrl.u32 %v1775, 7
  %v1777 = vsub.s32 %v1714, %v1776
  %v1778 = vrot.slane %v1612, %v1777
  %v1779 = vlaneseq
  %v1780 = vshrl.u32 %v1779, 7
  %v1781 = vsub.s32 %v1714, %v1780
  %v1782 = vrot.slane %v1613, %v1781
  %v1783 = vlaneseq
  %v1784 = vshrl.u32 %v1783, 7
  %v1785 = vsub.s32 %v1714, %v1784
  %v1786 = vrot.slane %v1614, %v1785
  %v1787 = vlaneseq
  %v1788 = vshrl.u32 %v1787, 7
  %v1789 = vsub.s32 %v1714, %v1788
  %v1790 = vrot.slane %v1615, %v1789
  %v1791 = vlaneseq
  %v1792 = vshrl.u32 %v1791, 7
  %v1793 = vsub.s32 %v1714, %v1792
  %v1794 = vrot.slane %v1616, %v1793
  %v1795 = vlaneseq
  %v1796 = vshrl.u32 %v1795, 7
  %v1797 = vsub.s32 %v1714, %v1796
  %v1798 = vrot.slane %v1617, %v1797
  %v1799 = vlaneseq
  %v1800 = vshrl.u32 %v1799, 7
  %v1801 = vsub.s32 %v1714, %v1800
  %v1802 = vrot.slane %v1618, %v1801
  %v1803 = vlaneseq
  %v1804 = vshrl.u32 %v1803, 7
  %v1805 = vsub.s32 %v1714, %v1804
  %v1806 = vrot.slane %v1619, %v1805
  %v1807 = vlaneseq
  %v1808 = vshrl.u32 %v1807, 7
  %v1809 = vsub.s32 %v1714, %v1808
  %v1810 = vrot.slane %v1620, %v1809
  %v1811 = vlaneseq
  %v1812 = vshrl.u32 %v1811, 7
  %v1813 = vsub.s32 %v1714, %v1812
  %v1814 = vrot.slane %v1621, %v1813
  %v1815 = vlaneseq
  %v1816 = vshrl.u32 %v1815, 7
  %v1817 = vsub.s32 %v1714, %v1816
  %v1818 = vrot.slane %v1622, %v1817
  %v1819 = vlaneseq
  %v1820 = vshrl.u32 %v1819, 7
  %v1821 = vsub.s32 %v1714, %v1820
  %v1822 = vrot.slane %v1623, %v1821
  %v1823 = vlaneseq
  %v1824 = vshrl.u32 %v1823, 7
  %v1825 = vsub.s32 %v1714, %v1824
  %v1826 = vrot.slane %v1624, %v1825
  %v1827 = vlaneseq
  %v1828 = vshrl.u32 %v1827, 7
  %v1829 = vsub.s32 %v1714, %v1828
  %v1830 = vrot.slane %v1625, %v1829
  %v1831 = vlaneseq
  %v1832 = vshrl.u32 %v1831, 7
  %v1833 = vsub.s32 %v1714, %v1832
  %v1834 = vrot.slane %v1626, %v1833
  %v1835 = vlaneseq
  %v1836 = vshrl.u32 %v1835, 7
  %v1837 = vsub.s32 %v1714, %v1836
  %v1838 = vrot.slane %v1627, %v1837
  %v1839 = vlaneseq
  %v1840 = vshrl.u32 %v1839, 7
  %v1841 = vsub.s32 %v1714, %v1840
  %v1842 = vrot.slane %v1628, %v1841
  %v1843 = vlaneseq
  %v1844 = vshrl.u32 %v1843, 7
  %v1845 = vsub.s32 %v1714, %v1844
  %v1846 = vrot.slane %v1629, %v1845
  %v1847 = vlaneseq
  %v1848 = vshrl.u32 %v1847, 7
  %v1849 = vsub.s32 %v1714, %v1848
  %v1850 = vrot.slane %v1630, %v1849
  %v1851 = vlaneseq
  %v1852 = vshrl.u32 %v1851, 7
  %v1853 = vsub.s32 %v1714, %v1852
  %v1854 = vrot.slane %v1631, %v1853
  %v1855 = vlaneseq
  %v1856 = vshrl.u32 %v1855, 7
  %v1857 = vsub.s32 %v1714, %v1856
  %v1858 = vrot.slane %v1632, %v1857
  %v1859 = vlaneseq
  %v1860 = vshrl.u32 %v1859, 7
  %v1861 = vsub.s32 %v1714, %v1860
  %v1862 = vrot.slane %v1633, %v1861
  %v1863 = vlaneseq
  %v1864 = vshrl.u32 %v1863, 7
  %v1865 = vsub.s32 %v1714, %v1864
  %v1866 = vrot.slane %v1634, %v1865
  %v1867 = vlaneseq
  %v1868 = vshrl.u32 %v1867, 7
  %v1869 = vsub.s32 %v1714, %v1868
  %v1870 = vrot.slane %v1635, %v1869
  %v1871 = vlaneseq
  %v1872 = vshrl.u32 %v1871, 7
  %v1873 = vsub.s32 %v1714, %v1872
  %v1874 = vrot.slane %v1636, %v1873
  %v1875 = vlaneseq
  %v1876 = vshrl.u32 %v1875, 7
  %v1877 = vsub.s32 %v1714, %v1876
  %v1878 = vrot.slane %v1637, %v1877
  %v1879 = vlaneseq
  %v1880 = vshrl.u32 %v1879, 7
  %v1881 = vsub.s32 %v1714, %v1880
  %v1882 = vrot.slane %v1638, %v1881
  %v1883 = vlaneseq
  %v1884 = vshrl.u32 %v1883, 7
  %v1885 = vsub.s32 %v1714, %v1884
  %v1886 = vrot.slane %v1639, %v1885
  %v1887 = vlaneseq
  %v1888 = vshrl.u32 %v1887, 7
  %v1889 = vsub.s32 %v1714, %v1888
  %v1890 = vrot.slane %v1640, %v1889
  %v1891 = vlaneseq
  %v1892 = vshrl.u32 %v1891, 7
  %v1893 = vsub.s32 %v1714, %v1892
  %v1894 = vrot.slane %v1641, %v1893
  %v1895 = vlaneseq
  %v1896 = vshrl.u32 %v1895, 7
  %v1897 = vsub.s32 %v1714, %v1896
  %v1898 = vrot.slane %v1642, %v1897
  %v1899 = vlaneseq
  %v1900 = vshrl.u32 %v1899, 7
  %v1901 = vsub.s32 %v1714, %v1900
  %v1902 = vrot.slane %v1643, %v1901
  %v1903 = vlaneseq
  %v1904 = vshrl.u32 %v1903, 7
  %v1905 = vsub.s32 %v1714, %v1904
  %v1906 = vrot.slane %v1644, %v1905
  %v1907 = vlaneseq
  %v1908 = vshrl.u32 %v1907, 7
  %v1909 = vsub.s32 %v1714, %v1908
  %v1910 = vrot.slane %v1645, %v1909
  %v1911 = vlaneseq
  %v1912 = vshrl.u32 %v1911, 7
  %v1913 = vsub.s32 %v1714, %v1912
  %v1914 = vrot.slane %v1646, %v1913
  %v1915 = vlaneseq
  %v1916 = vshrl.u32 %v1915, 7
  %v1917 = vsub.s32 %v1714, %v1916
  %v1918 = vrot.slane %v1647, %v1917
  %v1919 = vlaneseq
  %v1920 = vshrl.u32 %v1919, 7
  %v1921 = vsub.s32 %v1714, %v1920
  %v1922 = vrot.slane %v1648, %v1921
  %v1923 = vlaneseq
  %v1924 = vshrl.u32 %v1923, 7
  %v1925 = vsub.s32 %v1714, %v1924
  %v1926 = vrot.slane %v1649, %v1925
  %v1927 = vlaneseq
  %v1928 = vshrl.u32 %v1927, 7
  %v1929 = vsub.s32 %v1714, %v1928
  %v1930 = vrot.slane %v1650, %v1929
  %v1931 = vlaneseq
  %v1932 = vshrl.u32 %v1931, 7
  %v1933 = vsub.s32 %v1714, %v1932
  %v1934 = vrot.slane %v1651, %v1933
  %v1935 = vlaneseq
  %v1936 = vshrl.u32 %v1935, 7
  %v1937 = vsub.s32 %v1714, %v1936
  %v1938 = vrot.slane %v1652, %v1937
  %v1939 = vlaneseq
  %v1940 = vshrl.u32 %v1939, 7
  %v1941 = vsub.s32 %v1714, %v1940
  %v1942 = vrot.slane %v1653, %v1941
  %v1943 = vlaneseq
  %v1944 = vshrl.u32 %v1943, 7
  %v1945 = vsub.s32 %v1714, %v1944
  %v1946 = vrot.slane %v1654, %v1945
  %vm1947 = vcmask 1041409
  %v1948 = vsel %vm1947, %v1722, %v1718
  %vm1949 = vcmask 1042434
  %v1950 = vsel %vm1949, %v1726, %v1948
  %vm1951 = vcmask 1043459
  %v1952 = vsel %vm1951, %v1730, %v1950
  %vm1953 = vcmask 1044484
  %v1954 = vsel %vm1953, %v1734, %v1952
  %vm1955 = vcmask 1045509
  %v1956 = vsel %vm1955, %v1738, %v1954
  %vm1957 = vcmask 1046534
  %v1958 = vsel %vm1957, %v1742, %v1956
  %vm1959 = vcmask 1047559
  %v1960 = vsel %vm1959, %v1746, %v1958
  %v1961 = vsel %vm1947, %v1754, %v1750
  %v1962 = vsel %vm1949, %v1758, %v1961
  %v1963 = vsel %vm1951, %v1762, %v1962
  %v1964 = vsel %vm1953, %v1766, %v1963
  %v1965 = vsel %vm1955, %v1770, %v1964
  %v1966 = vsel %vm1957, %v1774, %v1965
  %v1967 = vsel %vm1959, %v1778, %v1966
  %v1968 = vsel %vm1947, %v1786, %v1782
  %v1969 = vsel %vm1949, %v1790, %v1968
  %v1970 = vsel %vm1951, %v1794, %v1969
  %v1971 = vsel %vm1953, %v1798, %v1970
  %v1972 = vsel %vm1955, %v1802, %v1971
  %v1973 = vsel %vm1957, %v1806, %v1972
  %v1974 = vsel %vm1959, %v1810, %v1973
  %v1975 = vsel %vm1947, %v1818, %v1814
  %v1976 = vsel %vm1949, %v1822, %v1975
  %v1977 = vsel %vm1951, %v1826, %v1976
  %v1978 = vsel %vm1953, %v1830, %v1977
  %v1979 = vsel %vm1955, %v1834, %v1978
  %v1980 = vsel %vm1957, %v1838, %v1979
  %v1981 = vsel %vm1959, %v1842, %v1980
  %v1982 = vsel %vm1947, %v1850, %v1846
  %v1983 = vsel %vm1949, %v1854, %v1982
  %v1984 = vsel %vm1951, %v1858, %v1983
  %v1985 = vsel %vm1953, %v1862, %v1984
  %v1986 = vsel %vm1955, %v1866, %v1985
  %v1987 = vsel %vm1957, %v1870, %v1986
  %v1988 = vsel %vm1959, %v1874, %v1987
  %v1989 = vsel %vm1947, %v1882, %v1878
  %v1990 = vsel %vm1949, %v1886, %v1989
  %v1991 = vsel %vm1951, %v1890, %v1990
  %v1992 = vsel %vm1953, %v1894, %v1991
  %v1993 = vsel %vm1955, %v1898, %v1992
  %v1994 = vsel %vm1957, %v1902, %v1993
  %v1995 = vsel %vm1959, %v1906, %v1994
  %v1996 = vsel %vm1947, %v1914, %v1910
  %v1997 = vsel %vm1949, %v1918, %v1996
  %v1998 = vsel %vm1951, %v1922, %v1997
  %v1999 = vsel %vm1953, %v1926, %v1998
  %v2000 = vsel %vm1955, %v1930, %v1999
  %v2001 = vsel %vm1957, %v1934, %v2000
  %v2002 = vsel %vm1959, %v1938, %v2001
  %v2003 = vsel %vm1947, %v1946, %v1942
  %vm2012 = vcmask 15360
  %2013 = vst.msk [vmem:[%s9] sm:$0xff] %vm2012, %v1960
  %2014 = vst.msk [vmem:[%s9 + $0x8] sm:$0xff] %vm2012, %v1967
  %2015 = vst.msk [vmem:[%s9 + $0x10] sm:$0xff] %vm2012, %v1974
  %2016 = vst.msk [vmem:[%s9 + $0x18] sm:$0xff] %vm2012, %v1981
  %2017 = vst.msk [vmem:[%s9 + $0x20] sm:$0xff] %vm2012, %v1988
  %2018 = vst.msk [vmem:[%s9 + $0x28] sm:$0xff] %vm2012, %v1995
  %2019 = vst.msk [vmem:[%s9 + $0x30] sm:$0xff] %vm2012, %v2002
  %vm2020 = vcmask 9216
  %2021 = vst.msk [vmem:[%s9 + $0x38] sm:$0x3] %vm2020, %v2003
  // Predicated region
  $region45: #{tpu_custom_call.1} parent=0 // pred_check
    _
  $region46: #{tpu_custom_call.1} parent=0 // pred_check_branch
    %2023 = sbr.rel (0) target = $region48
  $region47: #{tpu_custom_call.1} parent=0 // pred_region
    _
  $region48: #{tpu_custom_call.1} parent=0 // pred_fallthru
    _
  // Predicated region
  $region49: #{tpu_custom_call.1} parent=0 // pred_check
    _
  $region50: #{tpu_custom_call.1} parent=0 // pred_check_branch
    %2025 = sbr.rel (0) target = $region52
  $region51: #{tpu_custom_call.1} parent=0 // pred_region
    _
  $region52: #{tpu_custom_call.1} parent=0 // pred_fallthru
    _

</llo_original>
